<compile_context>
chip_gen: v7x
topology: tpu7x:2x2x1
jax: 0.10.0
libtpu: 0.0.40
codegen_flags: <defaults>
</compile_context>

<pallas_src>
import numpy as np
import jax
import jax.numpy as jnp
from jax.experimental import pallas as pl
from jax.experimental.pallas import tpu as pltpu

# ------------------------- model hyper-params (small) -------------------------
B = 2          # batch
N = 8          # num_patch (sequence length)
DIM = 32       # model dim
HEADS = 4
DIM_HEAD = 16
INNER = HEADS * DIM_HEAD       # 64
BN = B * N
LN_EPS = 1e-5
SCALE = DIM_HEAD ** (-0.5)
NEG_INF = -1e30


def attention_kernel(x_ref, params_ref, w_ref, bias_ref, o_ref):
    # x_ref: (BN, DIM) -- whole batch packed along the row (sublane) axis.
    x = x_ref[...]

    # packed LN/bias params: row 0 = gamma, row 1 = beta, row 2 = output bias
    p = params_ref[...]                                   # (3, DIM)
    gamma = p[0:1, :]
    beta = p[1:2, :]
    b_out = p[2:3, :]

    # ---- LayerNorm over last dim (eps=1e-5, affine, f32) ----
    mean = jnp.mean(x, axis=-1, keepdims=True)
    xc = x - mean
    var = jnp.mean(xc * xc, axis=-1, keepdims=True)
    xn = xc * jax.lax.rsqrt(var + LN_EPS) * gamma + beta  # (BN, DIM)

    # packed weights: [w_q * SCALE | w_k | w_v | w_out], each (H, d, DIM)
    w = w_ref[...]                                        # (4H, d, DIM)
    w_qkv = w[0:3 * HEADS]                                # (3H, d, DIM)
    w_o = w[3 * HEADS:]                                   # (H,  d, DIM)

    # ---- fused QKV projection: ONE head-batched contraction over 3H "heads" ----
    xn_b = jnp.broadcast_to(xn, (3 * HEADS, BN, DIM))     # single broadcast, reused once
    qkv = jnp.einsum('hnD,hdD->hnd', xn_b, w_qkv,
                     preferred_element_type=jnp.float32)  # (3H, BN, d)
    q = qkv[0:HEADS]                                      # SCALE already folded in
    k = qkv[HEADS:2 * HEADS]
    v = qkv[2 * HEADS:3 * HEADS]

    # ---- head-batched attention; bias is a precomputed block-diagonal constant ----
    dots = jnp.einsum('hnd,hmd->hnm', q, k,
                      preferred_element_type=jnp.float32) + bias_ref[...]   # (H, BN, BN)
    dots = dots - jnp.max(dots, axis=-1, keepdims=True)
    e = jnp.exp(dots)
    denom = jnp.sum(e, axis=-1, keepdims=True)
    r = pl.reciprocal(denom, approx=True)
    r = r * (2.0 - denom * r)              # one Newton step -> ~fp32-exact softmax
    attn = e * r                           # dropout is identity (p=0.0 / eval mode)
    out = jnp.einsum('hnm,hmd->hnd', attn, v,
                     preferred_element_type=jnp.float32)  # (H, BN, d)

    # ---- output projection with head-concat folded in ----
    # Accumulate per-head rank-2 matmul results directly (no (H,BN,DIM) intermediate).
    acc = jnp.dot(out[0], w_o[0], preferred_element_type=jnp.float32)        # (BN, DIM)
    for h in range(1, HEADS):
        acc = acc + jnp.dot(out[h], w_o[h], preferred_element_type=jnp.float32)
    o_ref[...] = (acc + b_out).astype(o_ref.dtype)


def attention_forward(x, gamma, beta, w_qkv, w_out, b_out):
    # (B, N, DIM) -> (B*N, DIM): leading-dim collapse, layout-preserving, done in XLA.
    x2d = x.reshape(BN, DIM)

    # Pack the three small vectors into one (3, DIM) array -> single DMA.
    params = jnp.stack([gamma, beta, b_out], axis=0)

    # Split fused QKV weight, pre-arrange per head as (H, d, DIM), fold SCALE into W_q,
    # and stack together with the output projection weight -> single (4H, d, DIM) DMA.
    w_q, w_k, w_v = jnp.split(w_qkv, 3, axis=1)           # each (DIM, INNER)

    def per_head(wm):  # (DIM, H*d) -> (H, d, DIM)
        return wm.reshape(DIM, HEADS, DIM_HEAD).transpose(1, 2, 0)

    weights = jnp.concatenate(
        [per_head(w_q) * SCALE,
         per_head(w_k),
         per_head(w_v),
         w_out.reshape(HEADS, DIM_HEAD, DIM)], axis=0)     # (4H, d, DIM)

    # Compile-time block-diagonal bias: a query only attends to keys of its own batch.
    row = np.arange(BN) // N
    bias_np = np.where(row[:, None] == row[None, :], 0.0, NEG_INF).astype(np.float32)
    bias = jnp.asarray(bias_np)                            # (BN, BN)

    flops = (2 * BN * DIM * 3 * INNER          # fused qkv projection
             + 4 * HEADS * BN * BN * DIM_HEAD  # dots + attn@v
             + 2 * BN * INNER * DIM)           # output projection
    bytes_accessed = 4 * (BN * DIM + 3 * DIM + 4 * HEADS * DIM_HEAD * DIM
                          + BN * BN + BN * DIM)

    out2d = pl.pallas_call(
        attention_kernel,
        out_shape=jax.ShapeDtypeStruct((BN, DIM), x.dtype),
        # Single step, no grid: whole-array VMEM residency, no pipeline scaffolding.
        # (For production B on v7x, add a leading "parallel" grid axis over batch so
        #  both TensorCores get work.)
        in_specs=[
            pl.BlockSpec(memory_space=pltpu.MemorySpace.VMEM),   # x (flattened)
            pl.BlockSpec(memory_space=pltpu.MemorySpace.VMEM),   # gamma/beta/b_out packed
            pl.BlockSpec(memory_space=pltpu.MemorySpace.VMEM),   # all weights packed
            pl.BlockSpec(memory_space=pltpu.MemorySpace.VMEM),   # block-diagonal bias
        ],
        out_specs=pl.BlockSpec(memory_space=pltpu.MemorySpace.VMEM),
        cost_estimate=pl.CostEstimate(flops=flops,
                                      transcendentals=HEADS * BN * BN,
                                      bytes_accessed=bytes_accessed),
    )(x2d, params, weights, bias)

    return out2d.reshape(B, N, DIM)


def reference_forward(x, gamma, beta, w_qkv, w_out, b_out):
    """Pure-JAX reference mirroring the PyTorch forward (eval mode)."""
    mean = jnp.mean(x, axis=-1, keepdims=True)
    var = jnp.mean((x - mean) ** 2, axis=-1, keepdims=True)
    xn = (x - mean) / jnp.sqrt(var + LN_EPS) * gamma + beta
    qkv = xn @ w_qkv                                        # (B, N, 3*INNER)
    q, k, v = jnp.split(qkv, 3, axis=-1)

    def to_heads(t):  # b n (h d) -> b h n d
        return t.reshape(B, N, HEADS, DIM_HEAD).transpose(0, 2, 1, 3)

    q, k, v = map(to_heads, (q, k, v))
    dots = jnp.einsum("bhnd,bhmd->bhnm", q, k) * SCALE
    attn = jax.nn.softmax(dots, axis=-1)
    out = jnp.einsum("bhnm,bhmd->bhnd", attn, v)
    out = out.transpose(0, 2, 1, 3).reshape(B, N, INNER)    # b h n d -> b n (h d)
    return out @ w_out + b_out


if __name__ == "__main__":
    key = jax.random.PRNGKey(0)
    kx, kg, kb, kq, kw, kbo = jax.random.split(key, 6)

    x = jax.random.normal(kx, (B, N, DIM), dtype=jnp.float32)

    # Deterministic parameter init (synthetic, not a checkpoint load).
    ln_gamma = jnp.ones((DIM,), jnp.float32) + 0.01 * jax.random.normal(kg, (DIM,), jnp.float32)
    ln_beta = 0.01 * jax.random.normal(kb, (DIM,), jnp.float32)
    w_qkv = jax.random.normal(kq, (DIM, 3 * INNER), jnp.float32) * (DIM ** -0.5)
    w_out = jax.random.normal(kw, (INNER, DIM), jnp.float32) * (INNER ** -0.5)
    b_out = 0.01 * jax.random.normal(kbo, (DIM,), jnp.float32)

    y = attention_forward(x, ln_gamma, ln_beta, w_qkv, w_out, b_out)
    y = jax.block_until_ready(y)

    y_ref = reference_forward(x, ln_gamma, ln_beta, w_qkv, w_out, b_out)
    assert y.shape == (B, N, DIM)
    assert jnp.allclose(y, y_ref, atol=1e-4, rtol=1e-4), "mismatch vs reference"

    print("KERNEL_OK")
</pallas_src>

<mosaic_0001>
module attributes {stable_mosaic.version = 11 : i64} {
  func.func @attention_kernel(%arg0: memref<16x32xf32, #tpu.memory_space<vmem>>, %arg1: memref<3x32xf32, #tpu.memory_space<vmem>>, %arg2: memref<16x16x32xf32, #tpu.memory_space<vmem>>, %arg3: memref<16x16xf32, #tpu.memory_space<vmem>>, %arg4: memref<16x32xf32, #tpu.memory_space<vmem>>) attributes {dimension_semantics = [], scalar_prefetch = 0 : i64, scratch_operands = 0 : i64, tpu.core_type = #tpu.core_type<tc>} {
    %c0 = arith.constant 0 : index
    %c0_0 = arith.constant 0 : index
    %0 = vector.load %arg0[%c0, %c0_0] : memref<16x32xf32, #tpu.memory_space<vmem>>, vector<16x32xf32>
    %c0_1 = arith.constant 0 : index
    %c0_2 = arith.constant 0 : index
    %1 = vector.load %arg1[%c0_1, %c0_2] : memref<3x32xf32, #tpu.memory_space<vmem>>, vector<3x32xf32>
    %2 = vector.extract_strided_slice %1 {offsets = [0, 0], sizes = [1, 32], strides = [1, 1]} : vector<3x32xf32> to vector<1x32xf32>
    %3 = vector.extract_strided_slice %1 {offsets = [1, 0], sizes = [1, 32], strides = [1, 1]} : vector<3x32xf32> to vector<1x32xf32>
    %4 = vector.extract_strided_slice %1 {offsets = [2, 0], sizes = [1, 32], strides = [1, 1]} : vector<3x32xf32> to vector<1x32xf32>
    %cst = arith.constant dense<0.000000e+00> : vector<16xf32>
    %5 = vector.multi_reduction <add>, %0, %cst [1] : vector<16x32xf32> to vector<16xf32>
    %6 = vector.shape_cast %5 : vector<16xf32> to vector<16x1xf32>
    %cst_3 = arith.constant 3.200000e+01 : f32
    %7 = vector.broadcast %cst_3 : f32 to vector<16x1xf32>
    %8 = arith.divf %6, %7 : vector<16x1xf32>
    %9 = vector.broadcast %8 : vector<16x1xf32> to vector<16x32xf32>
    %10 = arith.subf %0, %9 : vector<16x32xf32>
    %11 = arith.mulf %10, %10 : vector<16x32xf32>
    %cst_4 = arith.constant dense<0.000000e+00> : vector<16xf32>
    %12 = vector.multi_reduction <add>, %11, %cst_4 [1] : vector<16x32xf32> to vector<16xf32>
    %13 = vector.shape_cast %12 : vector<16xf32> to vector<16x1xf32>
    %cst_5 = arith.constant 3.200000e+01 : f32
    %14 = vector.broadcast %cst_5 : f32 to vector<16x1xf32>
    %15 = arith.divf %13, %14 : vector<16x1xf32>
    %cst_6 = arith.constant 9.99999974E-6 : f32
    %16 = vector.broadcast %cst_6 : f32 to vector<16x1xf32>
    %17 = arith.addf %15, %16 : vector<16x1xf32>
    %18 = math.rsqrt %17 : vector<16x1xf32>
    %19 = vector.broadcast %18 : vector<16x1xf32> to vector<16x32xf32>
    %20 = arith.mulf %10, %19 : vector<16x32xf32>
    %21 = vector.broadcast %2 : vector<1x32xf32> to vector<16x32xf32>
    %22 = arith.mulf %20, %21 : vector<16x32xf32>
    %23 = vector.broadcast %3 : vector<1x32xf32> to vector<16x32xf32>
    %24 = arith.addf %22, %23 : vector<16x32xf32>
    %c0_7 = arith.constant 0 : index
    %c0_8 = arith.constant 0 : index
    %c0_9 = arith.constant 0 : index
    %25 = vector.load %arg2[%c0_7, %c0_8, %c0_9] : memref<16x16x32xf32, #tpu.memory_space<vmem>>, vector<16x16x32xf32>
    %26 = vector.extract_strided_slice %25 {offsets = [0, 0, 0], sizes = [12, 16, 32], strides = [1, 1, 1]} : vector<16x16x32xf32> to vector<12x16x32xf32>
    %27 = vector.extract_strided_slice %25 {offsets = [12, 0, 0], sizes = [4, 16, 32], strides = [1, 1, 1]} : vector<16x16x32xf32> to vector<4x16x32xf32>
    %28 = vector.shape_cast %24 : vector<16x32xf32> to vector<1x16x32xf32>
    %29 = vector.broadcast %28 : vector<1x16x32xf32> to vector<12x16x32xf32>
    "tpu.trace_start"() <{level = 10 : i32, message = "hnD,hdD->hnd"}> : () -> ()
    %cst_10 = arith.constant dense<0.000000e+00> : vector<12x16x16xf32>
    %30 = tpu.matmul %29, %26, %cst_10 {dimension_numbers = #tpu.dot_dimension_numbers<[2], [2], [1], [1], [0, 0, 0, 1, 1, 1], [0], [0]>} : vector<12x16x32xf32>, vector<12x16x32xf32>, vector<12x16x16xf32> -> vector<12x16x16xf32>
    "tpu.trace_stop"() : () -> ()
    %31 = vector.extract_strided_slice %30 {offsets = [0, 0, 0], sizes = [4, 16, 16], strides = [1, 1, 1]} : vector<12x16x16xf32> to vector<4x16x16xf32>
    %32 = vector.extract_strided_slice %30 {offsets = [4, 0, 0], sizes = [4, 16, 16], strides = [1, 1, 1]} : vector<12x16x16xf32> to vector<4x16x16xf32>
    %33 = vector.extract_strided_slice %30 {offsets = [8, 0, 0], sizes = [4, 16, 16], strides = [1, 1, 1]} : vector<12x16x16xf32> to vector<4x16x16xf32>
    "tpu.trace_start"() <{level = 10 : i32, message = "hnd,hmd->hnm"}> : () -> ()
    %cst_11 = arith.constant dense<0.000000e+00> : vector<4x16x16xf32>
    %34 = tpu.matmul %31, %32, %cst_11 {dimension_numbers = #tpu.dot_dimension_numbers<[2], [2], [1], [1], [0, 0, 0, 1, 1, 1], [0], [0]>} : vector<4x16x16xf32>, vector<4x16x16xf32>, vector<4x16x16xf32> -> vector<4x16x16xf32>
    "tpu.trace_stop"() : () -> ()
    %c0_12 = arith.constant 0 : index
    %c0_13 = arith.constant 0 : index
    %35 = vector.load %arg3[%c0_12, %c0_13] : memref<16x16xf32, #tpu.memory_space<vmem>>, vector<16x16xf32>
    %36 = vector.shape_cast %35 : vector<16x16xf32> to vector<1x16x16xf32>
    %37 = vector.broadcast %36 : vector<1x16x16xf32> to vector<4x16x16xf32>
    %38 = arith.addf %34, %37 : vector<4x16x16xf32>
    %cst_14 = arith.constant dense<0xFF800000> : vector<4x16xf32>
    %39 = vector.multi_reduction <maximumf>, %38, %cst_14 [2] : vector<4x16x16xf32> to vector<4x16xf32>
    %40 = vector.shape_cast %39 : vector<4x16xf32> to vector<4x16x1xf32>
    %41 = vector.broadcast %40 : vector<4x16x1xf32> to vector<4x16x16xf32>
    %42 = arith.subf %38, %41 : vector<4x16x16xf32>
    %43 = math.exp %42 : vector<4x16x16xf32>
    %cst_15 = arith.constant dense<0.000000e+00> : vector<4x16xf32>
    %44 = vector.multi_reduction <add>, %43, %cst_15 [2] : vector<4x16x16xf32> to vector<4x16xf32>
    %45 = vector.shape_cast %44 : vector<4x16xf32> to vector<4x16x1xf32>
    %46 = tpu.reciprocal %45 {approx = true} : vector<4x16x1xf32> -> vector<4x16x1xf32>
    %47 = arith.mulf %45, %46 : vector<4x16x1xf32>
    %cst_16 = arith.constant 2.000000e+00 : f32
    %48 = vector.broadcast %cst_16 : f32 to vector<4x16x1xf32>
    %49 = arith.subf %48, %47 : vector<4x16x1xf32>
    %50 = arith.mulf %46, %49 : vector<4x16x1xf32>
    %51 = vector.broadcast %50 : vector<4x16x1xf32> to vector<4x16x16xf32>
    %52 = arith.mulf %43, %51 : vector<4x16x16xf32>
    "tpu.trace_start"() <{level = 10 : i32, message = "hnm,hmd->hnd"}> : () -> ()
    %cst_17 = arith.constant dense<0.000000e+00> : vector<4x16x16xf32>
    %53 = tpu.matmul %52, %33, %cst_17 {dimension_numbers = #tpu.dot_dimension_numbers<[2], [1], [1], [2], [0, 0, 0, 1, 1, 2], [0], [0]>} : vector<4x16x16xf32>, vector<4x16x16xf32>, vector<4x16x16xf32> -> vector<4x16x16xf32>
    "tpu.trace_stop"() : () -> ()
    %54 = vector.extract_strided_slice %53 {offsets = [0, 0, 0], sizes = [1, 16, 16], strides = [1, 1, 1]} : vector<4x16x16xf32> to vector<1x16x16xf32>
    %55 = vector.shape_cast %54 : vector<1x16x16xf32> to vector<16x16xf32>
    %56 = vector.extract_strided_slice %27 {offsets = [0, 0, 0], sizes = [1, 16, 32], strides = [1, 1, 1]} : vector<4x16x32xf32> to vector<1x16x32xf32>
    %57 = vector.shape_cast %56 : vector<1x16x32xf32> to vector<16x32xf32>
    %cst_18 = arith.constant dense<0.000000e+00> : vector<16x32xf32>
    %58 = tpu.matmul %55, %57, %cst_18 {dimension_numbers = #tpu.dot_dimension_numbers<[1], [0], [0], [1], [0, 0, 1, 1], [], []>} : vector<16x16xf32>, vector<16x32xf32>, vector<16x32xf32> -> vector<16x32xf32>
    %59 = vector.extract_strided_slice %53 {offsets = [1, 0, 0], sizes = [1, 16, 16], strides = [1, 1, 1]} : vector<4x16x16xf32> to vector<1x16x16xf32>
    %60 = vector.shape_cast %59 : vector<1x16x16xf32> to vector<16x16xf32>
    %61 = vector.extract_strided_slice %27 {offsets = [1, 0, 0], sizes = [1, 16, 32], strides = [1, 1, 1]} : vector<4x16x32xf32> to vector<1x16x32xf32>
    %62 = vector.shape_cast %61 : vector<1x16x32xf32> to vector<16x32xf32>
    %cst_19 = arith.constant dense<0.000000e+00> : vector<16x32xf32>
    %63 = tpu.matmul %60, %62, %cst_19 {dimension_numbers = #tpu.dot_dimension_numbers<[1], [0], [0], [1], [0, 0, 1, 1], [], []>} : vector<16x16xf32>, vector<16x32xf32>, vector<16x32xf32> -> vector<16x32xf32>
    %64 = arith.addf %58, %63 : vector<16x32xf32>
    %65 = vector.extract_strided_slice %53 {offsets = [2, 0, 0], sizes = [1, 16, 16], strides = [1, 1, 1]} : vector<4x16x16xf32> to vector<1x16x16xf32>
    %66 = vector.shape_cast %65 : vector<1x16x16xf32> to vector<16x16xf32>
    %67 = vector.extract_strided_slice %27 {offsets = [2, 0, 0], sizes = [1, 16, 32], strides = [1, 1, 1]} : vector<4x16x32xf32> to vector<1x16x32xf32>
    %68 = vector.shape_cast %67 : vector<1x16x32xf32> to vector<16x32xf32>
    %cst_20 = arith.constant dense<0.000000e+00> : vector<16x32xf32>
    %69 = tpu.matmul %66, %68, %cst_20 {dimension_numbers = #tpu.dot_dimension_numbers<[1], [0], [0], [1], [0, 0, 1, 1], [], []>} : vector<16x16xf32>, vector<16x32xf32>, vector<16x32xf32> -> vector<16x32xf32>
    %70 = arith.addf %64, %69 : vector<16x32xf32>
    %71 = vector.extract_strided_slice %53 {offsets = [3, 0, 0], sizes = [1, 16, 16], strides = [1, 1, 1]} : vector<4x16x16xf32> to vector<1x16x16xf32>
    %72 = vector.shape_cast %71 : vector<1x16x16xf32> to vector<16x16xf32>
    %73 = vector.extract_strided_slice %27 {offsets = [3, 0, 0], sizes = [1, 16, 32], strides = [1, 1, 1]} : vector<4x16x32xf32> to vector<1x16x32xf32>
    %74 = vector.shape_cast %73 : vector<1x16x32xf32> to vector<16x32xf32>
    %cst_21 = arith.constant dense<0.000000e+00> : vector<16x32xf32>
    %75 = tpu.matmul %72, %74, %cst_21 {dimension_numbers = #tpu.dot_dimension_numbers<[1], [0], [0], [1], [0, 0, 1, 1], [], []>} : vector<16x16xf32>, vector<16x32xf32>, vector<16x32xf32> -> vector<16x32xf32>
    %76 = arith.addf %70, %75 : vector<16x32xf32>
    %77 = vector.broadcast %4 : vector<1x32xf32> to vector<16x32xf32>
    %78 = arith.addf %76, %77 : vector<16x32xf32>
    %c0_22 = arith.constant 0 : index
    %c0_23 = arith.constant 0 : index
    %79 = vector.load %arg4[%c0_22, %c0_23] : memref<16x32xf32, #tpu.memory_space<vmem>>, vector<16x32xf32>
    tpu.vector_store %arg4[%c0_22, %c0_23], %78 {strides = array<i32>} : memref<16x32xf32, #tpu.memory_space<vmem>>, vector<16x32xf32>,
    return
  }
}

</mosaic_0001>

<llo_original>
// kernel: tpu_custom_call.1
$region0: #{tpu_custom_call.1}
  #allocation0 [shape = 'u32[]', space=smem, size = 0x4, offset = 0x4, fixed_abs, tag = 'smem constant byte address 0x4 - core index']
  #allocation1 [shape = 'u32[144,128]{1,0:T(1,128)}', space=vmem, size = 0x12000, scoped, tag = 'internal scratch']
  %s0 = inlined_call_operand.hbm [shape: f32[16,32], index: 0, kind: input, shape index: {}]
  %s1 = inlined_call_operand.hbm [shape: f32[3,32], index: 1, kind: input, shape index: {}]
  %s2 = inlined_call_operand.hbm [shape: f32[16,16,32], index: 2, kind: input, shape index: {}]
  %s3 = inlined_call_operand.hbm [shape: f32[16,16], index: 3, kind: input, shape index: {}]
  %s4 = inlined_call_operand.hbm [shape: f32[16,32], index: 4, kind: output, shape index: {}]
  %s5 = sld [smem:[#allocation0]]
  $region42: #{tpu_custom_call.1} parent=0
    _
  %s7 = ssub.s32 1, %s5
  %s8 = scalar_select 0, %s7, %s5
  $region1: #{tpu_custom_call.1} parent=0
    #allocation2 [shape = 'u8[8192]{0}', space=vmem, size = 0x2000, scoped, tag = 'input window, operand 0, single buffered']
    #allocation3 [shape = 's32[1]{0}', space=sflag, size = 0x4, scoped, tag = 'scoped memory for tpu_custom_call.1']
    #allocation4 [shape = 's32[1]{0}', space=sflag, size = 0x4, scoped, tag = 'scoped memory for tpu_custom_call.1']
    #allocation5 [shape = 'u8[2048]{0}', space=vmem, size = 0x800, scoped, tag = 'input window, operand 1, single buffered']
    #allocation6 [shape = 's32[1]{0}', space=sflag, size = 0x4, scoped, tag = 'scoped memory for tpu_custom_call.1']
    #allocation7 [shape = 'u8[131072]{0}', space=vmem, size = 0x20000, scoped, tag = 'input window, operand 2, single buffered']
    #allocation8 [shape = 'u8[8192]{0}', space=vmem, size = 0x2000, scoped, tag = 'input window, operand 3, single buffered']
    #allocation9 [shape = 's32[1]{0}', space=sflag, size = 0x4, scoped, tag = 'scoped memory for tpu_custom_call.1']
    #allocation10 [shape = 'u8[8192]{0}', space=vmem, size = 0x2000, scoped, tag = 'output window, operand 0, single buffered']
    %9 = vsyncpa [#allocation3], 0
    %10 = vsyncpa [#allocation6], 0
    %11 = vsyncpa [#allocation9], 0
    %12 = vsyncpa [#allocation4], 0
    // Predicated region
    $region2: #{tpu_custom_call.1} parent=1 // pred_check
      _
    $region3: #{tpu_custom_call.1} parent=1 // pred_check_branch
      %14 = sbr.rel (0) target = $region5
    $region4: #{tpu_custom_call.1} parent=1 // pred_region
      %s16 = ssub.s32 256, 256
      %17 = vsyncadd [#allocation3], %s16
      %s18 = sshll.u32 [#allocation2], 4
      %s19 = int_to_ptr.vmem [resolvable:$true] %s18
      %24 = dma.hbm_to_vmem [thread:$0]  %s0, 256, %s19, [#allocation3], 128, 128, 8
    $region5: #{tpu_custom_call.1} parent=1 // pred_fallthru
      _
    // Predicated region
    $region6: #{tpu_custom_call.1} parent=1 // pred_check
      _
    $region7: #{tpu_custom_call.1} parent=1 // pred_check_branch
      %26 = sbr.rel (0) target = $region9
    $region8: #{tpu_custom_call.1} parent=1 // pred_region
      %s28 = ssub.s32 64, 64
      %29 = vsyncadd [#allocation6], %s28
      %s31 = sshll.u32 [#allocation5], 4
      %s32 = int_to_ptr.vmem [resolvable:$true] %s31
      %34 = dma.hbm_to_vmem [thread:$0]  %s1, 64, %s32, [#allocation6]
    $region9: #{tpu_custom_call.1} parent=1 // pred_fallthru
      _
    // Predicated region
    $region10: #{tpu_custom_call.1} parent=1 // pred_check
      _
    $region11: #{tpu_custom_call.1} parent=1 // pred_check_branch
      %36 = sbr.rel (0) target = $region13
    $region12: #{tpu_custom_call.1} parent=1 // pred_region
      %s38 = ssub.s32 4096, 4096
      %39 = vsyncadd [#allocation6], %s38
      %s40 = sshll.u32 [#allocation7], 4
      %s41 = int_to_ptr.vmem [resolvable:$true] %s40
      %46 = dma.hbm_to_vmem [thread:$0]  %s2, 4096, %s41, [#allocation6], 128, 128, 8
    $region13: #{tpu_custom_call.1} parent=1 // pred_fallthru
      _
    // Predicated region
    $region14: #{tpu_custom_call.1} parent=1 // pred_check
      _
    $region15: #{tpu_custom_call.1} parent=1 // pred_check_branch
      %48 = sbr.rel (0) target = $region17
    $region16: #{tpu_custom_call.1} parent=1 // pred_region
      %s50 = ssub.s32 256, 256
      %51 = vsyncadd [#allocation9], %s50
      %s52 = sshll.u32 [#allocation8], 4
      %s53 = int_to_ptr.vmem [resolvable:$true] %s52
      %58 = dma.hbm_to_vmem [thread:$0]  %s3, 256, %s53, [#allocation9], 128, 128, 8
    $region17: #{tpu_custom_call.1} parent=1 // pred_fallthru
      _
    // Predicated region
    $region18: #{tpu_custom_call.1} parent=1 // pred_check
      _
    $region19: #{tpu_custom_call.1} parent=1 // pred_check_branch
      %60 = sbr.rel (0) target = $region21
    $region20: #{tpu_custom_call.1} parent=1 // pred_region
      %61 = dma.done [#allocation3], 256
    $region21: #{tpu_custom_call.1} parent=1 // pred_fallthru
      _
    // Predicated region
    $region22: #{tpu_custom_call.1} parent=1 // pred_check
      _
    $region23: #{tpu_custom_call.1} parent=1 // pred_check_branch
      %63 = sbr.rel (0) target = $region25
    $region24: #{tpu_custom_call.1} parent=1 // pred_region
      %64 = dma.done [#allocation6], 64
    $region25: #{tpu_custom_call.1} parent=1 // pred_fallthru
      _
    // Predicated region
    $region26: #{tpu_custom_call.1} parent=1 // pred_check
      _
    $region27: #{tpu_custom_call.1} parent=1 // pred_check_branch
      %66 = sbr.rel (0) target = $region29
    $region28: #{tpu_custom_call.1} parent=1 // pred_region
      %67 = dma.done [#allocation6], 4096
    $region29: #{tpu_custom_call.1} parent=1 // pred_fallthru
      _
    // Predicated region
    $region30: #{tpu_custom_call.1} parent=1 // pred_check
      _
    $region31: #{tpu_custom_call.1} parent=1 // pred_check_branch
      %69 = sbr.rel (0) target = $region33
    $region32: #{tpu_custom_call.1} parent=1 // pred_region
      %70 = dma.done [#allocation9], 256
    $region33: #{tpu_custom_call.1} parent=1 // pred_fallthru
      _
    %v71 = vld [vmem:[#allocation2] sm:$0xff]
    %v72 = vld [vmem:[#allocation2 + $0x8] sm:$0xff]
    %v73 = vld [vmem:[#allocation5] sm:$0x7]
    %vm74 = vcmask 261120
    %v75 = vsel %vm74, %v71, 0.0
    %76 = vadd.xlane.f32.xlu0 %v75
    %v77 = vpop.xlane.xlu0 %76
    %v78 = vsel %vm74, %v72, 0.0
    %79 = vadd.xlane.f32.xlu0 %v78
    %v80 = vpop.xlane.xlu0 %79
    %v81 = vrcp.pop 32.0
    %v82 = vmul.f32 %v77, %v81
    %v83 = vmul.f32 %v80, %v81
    %v84 = vsub.f32 %v71, %v82
    %v85 = vsub.f32 %v72, %v83
    %v86 = vmul.f32 %v84, %v84
    %v87 = vmul.f32 %v85, %v85
    %v88 = vsel %vm74, %v86, 0.0
    %89 = vadd.xlane.f32.xlu0 %v88
    %v90 = vpop.xlane.xlu0 %89
    %v91 = vsel %vm74, %v87, 0.0
    %92 = vadd.xlane.f32.xlu0 %v91
    %v93 = vpop.xlane.xlu0 %92
    %v94 = vmul.f32 %v90, %v81
    %v95 = vmul.f32 %v93, %v81
    %v96 = vadd.f32 %v94, 1e-05
    %v97 = vadd.f32 %v95, 1e-05
    %v98 = vrsqrt.pop %v96
    %v99 = vrsqrt.pop %v97
    %v100 = vmul.f32 %v84, %v98
    %v101 = vmul.f32 %v85, %v99
    %v102 = vlaneseq
    %v103 = vshrl.u32 %v102, 7
    %v104 = vsub.s32 0, %v103
    %v105 = vrot.slane %v73, %v104
    %v106 = vmul.f32 %v100, %v105
    %v107 = vmul.f32 %v101, %v105
    %v108 = vlaneseq
    %v109 = vshrl.u32 %v108, 7
    %v110 = vsub.s32 1, %v109
    %v111 = vrot.slane %v73, %v110
    %v112 = vadd.f32 %v106, %v111
    %v113 = vadd.f32 %v107, %v111
    %v114 = vld [vmem:[#allocation7] sm:$0xff]
    %v115 = vld [vmem:[#allocation7 + $0x8] sm:$0xff]
    %v116 = vld [vmem:[#allocation7 + $0x10] sm:$0xff]
    %v117 = vld [vmem:[#allocation7 + $0x18] sm:$0xff]
    %v118 = vld [vmem:[#allocation7 + $0x20] sm:$0xff]
    %v119 = vld [vmem:[#allocation7 + $0x28] sm:$0xff]
    %v120 = vld [vmem:[#allocation7 + $0x30] sm:$0xff]
    %v121 = vld [vmem:[#allocation7 + $0x38] sm:$0xff]
    %v122 = vld [vmem:[#allocation7 + $0x40] sm:$0xff]
    %v123 = vld [vmem:[#allocation7 + $0x48] sm:$0xff]
    %v124 = vld [vmem:[#allocation7 + $0x50] sm:$0xff]
    %v125 = vld [vmem:[#allocation7 + $0x58] sm:$0xff]
    %v126 = vld [vmem:[#allocation7 + $0x60] sm:$0xff]
    %v127 = vld [vmem:[#allocation7 + $0x68] sm:$0xff]
    %v128 = vld [vmem:[#allocation7 + $0x70] sm:$0xff]
    %v129 = vld [vmem:[#allocation7 + $0x78] sm:$0xff]
    %v130 = vld [vmem:[#allocation7 + $0x80] sm:$0xff]
    %v131 = vld [vmem:[#allocation7 + $0x88] sm:$0xff]
    %v132 = vld [vmem:[#allocation7 + $0x90] sm:$0xff]
    %v133 = vld [vmem:[#allocation7 + $0x98] sm:$0xff]
    %v134 = vld [vmem:[#allocation7 + $0xa0] sm:$0xff]
    %v135 = vld [vmem:[#allocation7 + $0xa8] sm:$0xff]
    %v136 = vld [vmem:[#allocation7 + $0xb0] sm:$0xff]
    %v137 = vld [vmem:[#allocation7 + $0xb8] sm:$0xff]
    %v138 = vld [vmem:[#allocation7 + $0xc0] sm:$0xff]
    %v139 = vld [vmem:[#allocation7 + $0xc8] sm:$0xff]
    %v140 = vld [vmem:[#allocation7 + $0xd0] sm:$0xff]
    %v141 = vld [vmem:[#allocation7 + $0xd8] sm:$0xff]
    %v142 = vld [vmem:[#allocation7 + $0xe0] sm:$0xff]
    %v143 = vld [vmem:[#allocation7 + $0xe8] sm:$0xff]
    %v144 = vld [vmem:[#allocation7 + $0xf0] sm:$0xff]
    %v145 = vld [vmem:[#allocation7 + $0xf8] sm:$0xff]
    %v147 = vsel %vm74, %v112, 0
    %v150 = vsel %vm74, %v113, 0
    %v153 = vsel %vm74, %v114, 0
    %v156 = vsel %vm74, %v115, 0
    %158 = vmatprep.subr.mxu0 0.0
    %159 = vmatpush1.xpose.msra.mxu0 %v153
    %160 = vmatprep.subr.mxu0 0.0
    %161 = vmatpush1.xpose.msra.mxu0 %v156
    %162 = vmatprep.subr.mxu0 0.0
    %163 = vmatpush1.xpose.msra.mxu0 0.0
    %164 = vmatprep.subr.mxu0 0.0
    %165 = vmatpush1.xpose.msra.mxu0 0.0
    %166 = vmatprep.subr.mxu0 0.0
    %167 = vmatpush1.xpose.msra.mxu0 0.0
    %168 = vmatprep.subr.mxu0 0.0
    %169 = vmatpush1.xpose.msra.mxu0 0.0
    %170 = vmatprep.subr.mxu0 0.0
    %171 = vmatpush1.xpose.msra.mxu0 0.0
    %172 = vmatprep.subr.mxu0 0.0
    %173 = vmatpush1.xpose.msra.mxu0 0.0
    %174 = vmatprep.subr.mxu0 0.0
    %175 = vmatpush1.xpose.msra.mxu0 0.0
    %176 = vmatprep.subr.mxu0 0.0
    %177 = vmatpush1.xpose.msra.mxu0 0.0
    %178 = vmatprep.subr.mxu0 0.0
    %179 = vmatpush1.xpose.msra.mxu0 0.0
    %180 = vmatprep.subr.mxu0 0.0
    %181 = vmatpush1.xpose.msra.mxu0 0.0
    %182 = vmatprep.subr.mxu0 0.0
    %183 = vmatpush1.xpose.msra.mxu0 0.0
    %184 = vmatprep.subr.mxu0 0.0
    %185 = vmatpush1.xpose.msra.mxu0 0.0
    %186 = vmatprep.subr.mxu0 0.0
    %187 = vmatpush1.xpose.msra.mxu0 0.0
    %188 = vmatprep.subr.mxu0 0.0
    %189 = vmatpush1.xpose.msra.mxu0 0.0
    %190 = vmatprep.subr.mxu0 0.0
    %191 = vmatpush1.xpose.msra.mxu0 0.0
    %192 = vmatprep.subr.mxu0 0.0
    %193 = vmatpush1.xpose.msra.mxu0 0.0
    %194 = vmatprep.subr.mxu0 0.0
    %195 = vmatpush1.xpose.msra.mxu0 0.0
    %196 = vmatprep.subr.mxu0 0.0
    %197 = vmatpush1.xpose.msra.mxu0 0.0
    %198 = vmatprep.subr.mxu0 0.0
    %199 = vmatpush1.xpose.msra.mxu0 0.0
    %200 = vmatprep.subr.mxu0 0.0
    %201 = vmatpush1.xpose.msra.mxu0 0.0
    %202 = vmatprep.subr.mxu0 0.0
    %203 = vmatpush1.xpose.msra.mxu0 0.0
    %204 = vmatprep.subr.mxu0 0.0
    %205 = vmatpush1.xpose.msra.mxu0 0.0
    %206 = vmatprep.subr.mxu0 0.0
    %207 = vmatpush1.xpose.msra.mxu0 0.0
    %208 = vmatprep.subr.mxu0 0.0
    %209 = vmatpush1.xpose.msra.mxu0 0.0
    %210 = vmatprep.subr.mxu0 0.0
    %211 = vmatpush1.xpose.msra.mxu0 0.0
    %212 = vmatprep.subr.mxu0 0.0
    %213 = vmatpush1.xpose.msra.mxu0 0.0
    %214 = vmatprep.subr.mxu0 0.0
    %215 = vmatpush1.xpose.msra.mxu0 0.0
    %216 = vmatprep.subr.mxu0 0.0
    %217 = vmatpush1.xpose.msra.mxu0 0.0
    %218 = vmatprep.subr.mxu0 0.0
    %219 = vmatpush1.xpose.msra.mxu0 0.0
    %220 = vmatprep.subr.mxu0 0.0
    %221 = vmatpush1.xpose.msra.mxu0 0.0
    %222 = vmatprep.mubr.f32.mxu0 0.0
    %223 = vmatmul.mubr.f32.gmra.mrb[0].mxu0 %v147
    %v224 = vpop.f32.mrb[0].mxu0
    %v225 = vadd.f32 0.0, %v224
    %v226 = vpop.f32.mrb[0].mxu0
    %227 = vmatprep.mubr.f32.mxu0 0.0
    %228 = vmatmul.mubr.f32.gmra.mrb[0].mxu0 %v150
    %v229 = vpop.f32.mrb[0].mxu0
    %v230 = vadd.f32 0.0, %v229
    %v231 = vpop.f32.mrb[0].mxu0
    %232 = vdwg.mxu0
    %v234 = vsel %vm74, %v116, 0
    %v237 = vsel %vm74, %v117, 0
    %239 = vmatprep.subr.mxu0 0.0
    %240 = vmatpush1.xpose.msra.mxu0 %v234
    %241 = vmatprep.subr.mxu0 0.0
    %242 = vmatpush1.xpose.msra.mxu0 %v237
    %243 = vmatprep.subr.mxu0 0.0
    %244 = vmatpush1.xpose.msra.mxu0 0.0
    %245 = vmatprep.subr.mxu0 0.0
    %246 = vmatpush1.xpose.msra.mxu0 0.0
    %247 = vmatprep.subr.mxu0 0.0
    %248 = vmatpush1.xpose.msra.mxu0 0.0
    %249 = vmatprep.subr.mxu0 0.0
    %250 = vmatpush1.xpose.msra.mxu0 0.0
    %251 = vmatprep.subr.mxu0 0.0
    %252 = vmatpush1.xpose.msra.mxu0 0.0
    %253 = vmatprep.subr.mxu0 0.0
    %254 = vmatpush1.xpose.msra.mxu0 0.0
    %255 = vmatprep.subr.mxu0 0.0
    %256 = vmatpush1.xpose.msra.mxu0 0.0
    %257 = vmatprep.subr.mxu0 0.0
    %258 = vmatpush1.xpose.msra.mxu0 0.0
    %259 = vmatprep.subr.mxu0 0.0
    %260 = vmatpush1.xpose.msra.mxu0 0.0
    %261 = vmatprep.subr.mxu0 0.0
    %262 = vmatpush1.xpose.msra.mxu0 0.0
    %263 = vmatprep.subr.mxu0 0.0
    %264 = vmatpush1.xpose.msra.mxu0 0.0
    %265 = vmatprep.subr.mxu0 0.0
    %266 = vmatpush1.xpose.msra.mxu0 0.0
    %267 = vmatprep.subr.mxu0 0.0
    %268 = vmatpush1.xpose.msra.mxu0 0.0
    %269 = vmatprep.subr.mxu0 0.0
    %270 = vmatpush1.xpose.msra.mxu0 0.0
    %271 = vmatprep.subr.mxu0 0.0
    %272 = vmatpush1.xpose.msra.mxu0 0.0
    %273 = vmatprep.subr.mxu0 0.0
    %274 = vmatpush1.xpose.msra.mxu0 0.0
    %275 = vmatprep.subr.mxu0 0.0
    %276 = vmatpush1.xpose.msra.mxu0 0.0
    %277 = vmatprep.subr.mxu0 0.0
    %278 = vmatpush1.xpose.msra.mxu0 0.0
    %279 = vmatprep.subr.mxu0 0.0
    %280 = vmatpush1.xpose.msra.mxu0 0.0
    %281 = vmatprep.subr.mxu0 0.0
    %282 = vmatpush1.xpose.msra.mxu0 0.0
    %283 = vmatprep.subr.mxu0 0.0
    %284 = vmatpush1.xpose.msra.mxu0 0.0
    %285 = vmatprep.subr.mxu0 0.0
    %286 = vmatpush1.xpose.msra.mxu0 0.0
    %287 = vmatprep.subr.mxu0 0.0
    %288 = vmatpush1.xpose.msra.mxu0 0.0
    %289 = vmatprep.subr.mxu0 0.0
    %290 = vmatpush1.xpose.msra.mxu0 0.0
    %291 = vmatprep.subr.mxu0 0.0
    %292 = vmatpush1.xpose.msra.mxu0 0.0
    %293 = vmatprep.subr.mxu0 0.0
    %294 = vmatpush1.xpose.msra.mxu0 0.0
    %295 = vmatprep.subr.mxu0 0.0
    %296 = vmatpush1.xpose.msra.mxu0 0.0
    %297 = vmatprep.subr.mxu0 0.0
    %298 = vmatpush1.xpose.msra.mxu0 0.0
    %299 = vmatprep.subr.mxu0 0.0
    %300 = vmatpush1.xpose.msra.mxu0 0.0
    %301 = vmatprep.subr.mxu0 0.0
    %302 = vmatpush1.xpose.msra.mxu0 0.0
    %303 = vmatprep.mubr.f32.mxu0 0.0
    %304 = vmatmul.mubr.f32.gmra.mrb[0].mxu0 %v147
    %v305 = vpop.f32.mrb[0].mxu0
    %v306 = vadd.f32 0.0, %v305
    %v307 = vpop.f32.mrb[0].mxu0
    %308 = vmatprep.mubr.f32.mxu0 0.0
    %309 = vmatmul.mubr.f32.gmra.mrb[0].mxu0 %v150
    %v310 = vpop.f32.mrb[0].mxu0
    %v311 = vadd.f32 0.0, %v310
    %v312 = vpop.f32.mrb[0].mxu0
    %313 = vdwg.mxu0
    %v315 = vsel %vm74, %v118, 0
    %v318 = vsel %vm74, %v119, 0
    %320 = vmatprep.subr.mxu0 0.0
    %321 = vmatpush1.xpose.msra.mxu0 %v315
    %322 = vmatprep.subr.mxu0 0.0
    %323 = vmatpush1.xpose.msra.mxu0 %v318
    %324 = vmatprep.subr.mxu0 0.0
    %325 = vmatpush1.xpose.msra.mxu0 0.0
    %326 = vmatprep.subr.mxu0 0.0
    %327 = vmatpush1.xpose.msra.mxu0 0.0
    %328 = vmatprep.subr.mxu0 0.0
    %329 = vmatpush1.xpose.msra.mxu0 0.0
    %330 = vmatprep.subr.mxu0 0.0
    %331 = vmatpush1.xpose.msra.mxu0 0.0
    %332 = vmatprep.subr.mxu0 0.0
    %333 = vmatpush1.xpose.msra.mxu0 0.0
    %334 = vmatprep.subr.mxu0 0.0
    %335 = vmatpush1.xpose.msra.mxu0 0.0
    %336 = vmatprep.subr.mxu0 0.0
    %337 = vmatpush1.xpose.msra.mxu0 0.0
    %338 = vmatprep.subr.mxu0 0.0
    %339 = vmatpush1.xpose.msra.mxu0 0.0
    %340 = vmatprep.subr.mxu0 0.0
    %341 = vmatpush1.xpose.msra.mxu0 0.0
    %342 = vmatprep.subr.mxu0 0.0
    %343 = vmatpush1.xpose.msra.mxu0 0.0
    %344 = vmatprep.subr.mxu0 0.0
    %345 = vmatpush1.xpose.msra.mxu0 0.0
    %346 = vmatprep.subr.mxu0 0.0
    %347 = vmatpush1.xpose.msra.mxu0 0.0
    %348 = vmatprep.subr.mxu0 0.0
    %349 = vmatpush1.xpose.msra.mxu0 0.0
    %350 = vmatprep.subr.mxu0 0.0
    %351 = vmatpush1.xpose.msra.mxu0 0.0
    %352 = vmatprep.subr.mxu0 0.0
    %353 = vmatpush1.xpose.msra.mxu0 0.0
    %354 = vmatprep.subr.mxu0 0.0
    %355 = vmatpush1.xpose.msra.mxu0 0.0
    %356 = vmatprep.subr.mxu0 0.0
    %357 = vmatpush1.xpose.msra.mxu0 0.0
    %358 = vmatprep.subr.mxu0 0.0
    %359 = vmatpush1.xpose.msra.mxu0 0.0
    %360 = vmatprep.subr.mxu0 0.0
    %361 = vmatpush1.xpose.msra.mxu0 0.0
    %362 = vmatprep.subr.mxu0 0.0
    %363 = vmatpush1.xpose.msra.mxu0 0.0
    %364 = vmatprep.subr.mxu0 0.0
    %365 = vmatpush1.xpose.msra.mxu0 0.0
    %366 = vmatprep.subr.mxu0 0.0
    %367 = vmatpush1.xpose.msra.mxu0 0.0
    %368 = vmatprep.subr.mxu0 0.0
    %369 = vmatpush1.xpose.msra.mxu0 0.0
    %370 = vmatprep.subr.mxu0 0.0
    %371 = vmatpush1.xpose.msra.mxu0 0.0
    %372 = vmatprep.subr.mxu0 0.0
    %373 = vmatpush1.xpose.msra.mxu0 0.0
    %374 = vmatprep.subr.mxu0 0.0
    %375 = vmatpush1.xpose.msra.mxu0 0.0
    %376 = vmatprep.subr.mxu0 0.0
    %377 = vmatpush1.xpose.msra.mxu0 0.0
    %378 = vmatprep.subr.mxu0 0.0
    %379 = vmatpush1.xpose.msra.mxu0 0.0
    %380 = vmatprep.subr.mxu0 0.0
    %381 = vmatpush1.xpose.msra.mxu0 0.0
    %382 = vmatprep.subr.mxu0 0.0
    %383 = vmatpush1.xpose.msra.mxu0 0.0
    %384 = vmatprep.mubr.f32.mxu0 0.0
    %385 = vmatmul.mubr.f32.gmra.mrb[0].mxu0 %v147
    %v386 = vpop.f32.mrb[0].mxu0
    %v387 = vadd.f32 0.0, %v386
    %v388 = vpop.f32.mrb[0].mxu0
    %389 = vmatprep.mubr.f32.mxu0 0.0
    %390 = vmatmul.mubr.f32.gmra.mrb[0].mxu0 %v150
    %v391 = vpop.f32.mrb[0].mxu0
    %v392 = vadd.f32 0.0, %v391
    %v393 = vpop.f32.mrb[0].mxu0
    %394 = vdwg.mxu0
    %v396 = vsel %vm74, %v120, 0
    %v399 = vsel %vm74, %v121, 0
    %401 = vmatprep.subr.mxu0 0.0
    %402 = vmatpush1.xpose.msra.mxu0 %v396
    %403 = vmatprep.subr.mxu0 0.0
    %404 = vmatpush1.xpose.msra.mxu0 %v399
    %405 = vmatprep.subr.mxu0 0.0
    %406 = vmatpush1.xpose.msra.mxu0 0.0
    %407 = vmatprep.subr.mxu0 0.0
    %408 = vmatpush1.xpose.msra.mxu0 0.0
    %409 = vmatprep.subr.mxu0 0.0
    %410 = vmatpush1.xpose.msra.mxu0 0.0
    %411 = vmatprep.subr.mxu0 0.0
    %412 = vmatpush1.xpose.msra.mxu0 0.0
    %413 = vmatprep.subr.mxu0 0.0
    %414 = vmatpush1.xpose.msra.mxu0 0.0
    %415 = vmatprep.subr.mxu0 0.0
    %416 = vmatpush1.xpose.msra.mxu0 0.0
    %417 = vmatprep.subr.mxu0 0.0
    %418 = vmatpush1.xpose.msra.mxu0 0.0
    %419 = vmatprep.subr.mxu0 0.0
    %420 = vmatpush1.xpose.msra.mxu0 0.0
    %421 = vmatprep.subr.mxu0 0.0
    %422 = vmatpush1.xpose.msra.mxu0 0.0
    %423 = vmatprep.subr.mxu0 0.0
    %424 = vmatpush1.xpose.msra.mxu0 0.0
    %425 = vmatprep.subr.mxu0 0.0
    %426 = vmatpush1.xpose.msra.mxu0 0.0
    %427 = vmatprep.subr.mxu0 0.0
    %428 = vmatpush1.xpose.msra.mxu0 0.0
    %429 = vmatprep.subr.mxu0 0.0
    %430 = vmatpush1.xpose.msra.mxu0 0.0
    %431 = vmatprep.subr.mxu0 0.0
    %432 = vmatpush1.xpose.msra.mxu0 0.0
    %433 = vmatprep.subr.mxu0 0.0
    %434 = vmatpush1.xpose.msra.mxu0 0.0
    %435 = vmatprep.subr.mxu0 0.0
    %436 = vmatpush1.xpose.msra.mxu0 0.0
    %437 = vmatprep.subr.mxu0 0.0
    %438 = vmatpush1.xpose.msra.mxu0 0.0
    %439 = vmatprep.subr.mxu0 0.0
    %440 = vmatpush1.xpose.msra.mxu0 0.0
    %441 = vmatprep.subr.mxu0 0.0
    %442 = vmatpush1.xpose.msra.mxu0 0.0
    %443 = vmatprep.subr.mxu0 0.0
    %444 = vmatpush1.xpose.msra.mxu0 0.0
    %445 = vmatprep.subr.mxu0 0.0
    %446 = vmatpush1.xpose.msra.mxu0 0.0
    %447 = vmatprep.subr.mxu0 0.0
    %448 = vmatpush1.xpose.msra.mxu0 0.0
    %449 = vmatprep.subr.mxu0 0.0
    %450 = vmatpush1.xpose.msra.mxu0 0.0
    %451 = vmatprep.subr.mxu0 0.0
    %452 = vmatpush1.xpose.msra.mxu0 0.0
    %453 = vmatprep.subr.mxu0 0.0
    %454 = vmatpush1.xpose.msra.mxu0 0.0
    %455 = vmatprep.subr.mxu0 0.0
    %456 = vmatpush1.xpose.msra.mxu0 0.0
    %457 = vmatprep.subr.mxu0 0.0
    %458 = vmatpush1.xpose.msra.mxu0 0.0
    %459 = vmatprep.subr.mxu0 0.0
    %460 = vmatpush1.xpose.msra.mxu0 0.0
    %461 = vmatprep.subr.mxu0 0.0
    %462 = vmatpush1.xpose.msra.mxu0 0.0
    %463 = vmatprep.subr.mxu0 0.0
    %464 = vmatpush1.xpose.msra.mxu0 0.0
    %465 = vmatprep.mubr.f32.mxu0 0.0
    %466 = vmatmul.mubr.f32.gmra.mrb[0].mxu0 %v147
    %v467 = vpop.f32.mrb[0].mxu0
    %v468 = vadd.f32 0.0, %v467
    %v469 = vpop.f32.mrb[0].mxu0
    %470 = vmatprep.mubr.f32.mxu0 0.0
    %471 = vmatmul.mubr.f32.gmra.mrb[0].mxu0 %v150
    %v472 = vpop.f32.mrb[0].mxu0
    %v473 = vadd.f32 0.0, %v472
    %v474 = vpop.f32.mrb[0].mxu0
    %475 = vdwg.mxu0
    %v477 = vsel %vm74, %v122, 0
    %v480 = vsel %vm74, %v123, 0
    %482 = vmatprep.subr.mxu0 0.0
    %483 = vmatpush1.xpose.msra.mxu0 %v477
    %484 = vmatprep.subr.mxu0 0.0
    %485 = vmatpush1.xpose.msra.mxu0 %v480
    %486 = vmatprep.subr.mxu0 0.0
    %487 = vmatpush1.xpose.msra.mxu0 0.0
    %488 = vmatprep.subr.mxu0 0.0
    %489 = vmatpush1.xpose.msra.mxu0 0.0
    %490 = vmatprep.subr.mxu0 0.0
    %491 = vmatpush1.xpose.msra.mxu0 0.0
    %492 = vmatprep.subr.mxu0 0.0
    %493 = vmatpush1.xpose.msra.mxu0 0.0
    %494 = vmatprep.subr.mxu0 0.0
    %495 = vmatpush1.xpose.msra.mxu0 0.0
    %496 = vmatprep.subr.mxu0 0.0
    %497 = vmatpush1.xpose.msra.mxu0 0.0
    %498 = vmatprep.subr.mxu0 0.0
    %499 = vmatpush1.xpose.msra.mxu0 0.0
    %500 = vmatprep.subr.mxu0 0.0
    %501 = vmatpush1.xpose.msra.mxu0 0.0
    %502 = vmatprep.subr.mxu0 0.0
    %503 = vmatpush1.xpose.msra.mxu0 0.0
    %504 = vmatprep.subr.mxu0 0.0
    %505 = vmatpush1.xpose.msra.mxu0 0.0
    %506 = vmatprep.subr.mxu0 0.0
    %507 = vmatpush1.xpose.msra.mxu0 0.0
    %508 = vmatprep.subr.mxu0 0.0
    %509 = vmatpush1.xpose.msra.mxu0 0.0
    %510 = vmatprep.subr.mxu0 0.0
    %511 = vmatpush1.xpose.msra.mxu0 0.0
    %512 = vmatprep.subr.mxu0 0.0
    %513 = vmatpush1.xpose.msra.mxu0 0.0
    %514 = vmatprep.subr.mxu0 0.0
    %515 = vmatpush1.xpose.msra.mxu0 0.0
    %516 = vmatprep.subr.mxu0 0.0
    %517 = vmatpush1.xpose.msra.mxu0 0.0
    %518 = vmatprep.subr.mxu0 0.0
    %519 = vmatpush1.xpose.msra.mxu0 0.0
    %520 = vmatprep.subr.mxu0 0.0
    %521 = vmatpush1.xpose.msra.mxu0 0.0
    %522 = vmatprep.subr.mxu0 0.0
    %523 = vmatpush1.xpose.msra.mxu0 0.0
    %524 = vmatprep.subr.mxu0 0.0
    %525 = vmatpush1.xpose.msra.mxu0 0.0
    %526 = vmatprep.subr.mxu0 0.0
    %527 = vmatpush1.xpose.msra.mxu0 0.0
    %528 = vmatprep.subr.mxu0 0.0
    %529 = vmatpush1.xpose.msra.mxu0 0.0
    %530 = vmatprep.subr.mxu0 0.0
    %531 = vmatpush1.xpose.msra.mxu0 0.0
    %532 = vmatprep.subr.mxu0 0.0
    %533 = vmatpush1.xpose.msra.mxu0 0.0
    %534 = vmatprep.subr.mxu0 0.0
    %535 = vmatpush1.xpose.msra.mxu0 0.0
    %536 = vmatprep.subr.mxu0 0.0
    %537 = vmatpush1.xpose.msra.mxu0 0.0
    %538 = vmatprep.subr.mxu0 0.0
    %539 = vmatpush1.xpose.msra.mxu0 0.0
    %540 = vmatprep.subr.mxu0 0.0
    %541 = vmatpush1.xpose.msra.mxu0 0.0
    %542 = vmatprep.subr.mxu0 0.0
    %543 = vmatpush1.xpose.msra.mxu0 0.0
    %544 = vmatprep.subr.mxu0 0.0
    %545 = vmatpush1.xpose.msra.mxu0 0.0
    %546 = vmatprep.mubr.f32.mxu0 0.0
    %547 = vmatmul.mubr.f32.gmra.mrb[0].mxu0 %v147
    %v548 = vpop.f32.mrb[0].mxu0
    %v549 = vadd.f32 0.0, %v548
    %v550 = vpop.f32.mrb[0].mxu0
    %551 = vmatprep.mubr.f32.mxu0 0.0
    %552 = vmatmul.mubr.f32.gmra.mrb[0].mxu0 %v150
    %v553 = vpop.f32.mrb[0].mxu0
    %v554 = vadd.f32 0.0, %v553
    %v555 = vpop.f32.mrb[0].mxu0
    %556 = vdwg.mxu0
    %v558 = vsel %vm74, %v124, 0
    %v561 = vsel %vm74, %v125, 0
    %563 = vmatprep.subr.mxu0 0.0
    %564 = vmatpush1.xpose.msra.mxu0 %v558
    %565 = vmatprep.subr.mxu0 0.0
    %566 = vmatpush1.xpose.msra.mxu0 %v561
    %567 = vmatprep.subr.mxu0 0.0
    %568 = vmatpush1.xpose.msra.mxu0 0.0
    %569 = vmatprep.subr.mxu0 0.0
    %570 = vmatpush1.xpose.msra.mxu0 0.0
    %571 = vmatprep.subr.mxu0 0.0
    %572 = vmatpush1.xpose.msra.mxu0 0.0
    %573 = vmatprep.subr.mxu0 0.0
    %574 = vmatpush1.xpose.msra.mxu0 0.0
    %575 = vmatprep.subr.mxu0 0.0
    %576 = vmatpush1.xpose.msra.mxu0 0.0
    %577 = vmatprep.subr.mxu0 0.0
    %578 = vmatpush1.xpose.msra.mxu0 0.0
    %579 = vmatprep.subr.mxu0 0.0
    %580 = vmatpush1.xpose.msra.mxu0 0.0
    %581 = vmatprep.subr.mxu0 0.0
    %582 = vmatpush1.xpose.msra.mxu0 0.0
    %583 = vmatprep.subr.mxu0 0.0
    %584 = vmatpush1.xpose.msra.mxu0 0.0
    %585 = vmatprep.subr.mxu0 0.0
    %586 = vmatpush1.xpose.msra.mxu0 0.0
    %587 = vmatprep.subr.mxu0 0.0
    %588 = vmatpush1.xpose.msra.mxu0 0.0
    %589 = vmatprep.subr.mxu0 0.0
    %590 = vmatpush1.xpose.msra.mxu0 0.0
    %591 = vmatprep.subr.mxu0 0.0
    %592 = vmatpush1.xpose.msra.mxu0 0.0
    %593 = vmatprep.subr.mxu0 0.0
    %594 = vmatpush1.xpose.msra.mxu0 0.0
    %595 = vmatprep.subr.mxu0 0.0
    %596 = vmatpush1.xpose.msra.mxu0 0.0
    %597 = vmatprep.subr.mxu0 0.0
    %598 = vmatpush1.xpose.msra.mxu0 0.0
    %599 = vmatprep.subr.mxu0 0.0
    %600 = vmatpush1.xpose.msra.mxu0 0.0
    %601 = vmatprep.subr.mxu0 0.0
    %602 = vmatpush1.xpose.msra.mxu0 0.0
    %603 = vmatprep.subr.mxu0 0.0
    %604 = vmatpush1.xpose.msra.mxu0 0.0
    %605 = vmatprep.subr.mxu0 0.0
    %606 = vmatpush1.xpose.msra.mxu0 0.0
    %607 = vmatprep.subr.mxu0 0.0
    %608 = vmatpush1.xpose.msra.mxu0 0.0
    %609 = vmatprep.subr.mxu0 0.0
    %610 = vmatpush1.xpose.msra.mxu0 0.0
    %611 = vmatprep.subr.mxu0 0.0
    %612 = vmatpush1.xpose.msra.mxu0 0.0
    %613 = vmatprep.subr.mxu0 0.0
    %614 = vmatpush1.xpose.msra.mxu0 0.0
    %615 = vmatprep.subr.mxu0 0.0
    %616 = vmatpush1.xpose.msra.mxu0 0.0
    %617 = vmatprep.subr.mxu0 0.0
    %618 = vmatpush1.xpose.msra.mxu0 0.0
    %619 = vmatprep.subr.mxu0 0.0
    %620 = vmatpush1.xpose.msra.mxu0 0.0
    %621 = vmatprep.subr.mxu0 0.0
    %622 = vmatpush1.xpose.msra.mxu0 0.0
    %623 = vmatprep.subr.mxu0 0.0
    %624 = vmatpush1.xpose.msra.mxu0 0.0
    %625 = vmatprep.subr.mxu0 0.0
    %626 = vmatpush1.xpose.msra.mxu0 0.0
    %627 = vmatprep.mubr.f32.mxu0 0.0
    %628 = vmatmul.mubr.f32.gmra.mrb[0].mxu0 %v147
    %v629 = vpop.f32.mrb[0].mxu0
    %v630 = vadd.f32 0.0, %v629
    %v631 = vpop.f32.mrb[0].mxu0
    %632 = vmatprep.mubr.f32.mxu0 0.0
    %633 = vmatmul.mubr.f32.gmra.mrb[0].mxu0 %v150
    %v634 = vpop.f32.mrb[0].mxu0
    %v635 = vadd.f32 0.0, %v634
    %v636 = vpop.f32.mrb[0].mxu0
    %637 = vdwg.mxu0
    %v639 = vsel %vm74, %v126, 0
    %v642 = vsel %vm74, %v127, 0
    %644 = vmatprep.subr.mxu0 0.0
    %645 = vmatpush1.xpose.msra.mxu0 %v639
    %646 = vmatprep.subr.mxu0 0.0
    %647 = vmatpush1.xpose.msra.mxu0 %v642
    %648 = vmatprep.subr.mxu0 0.0
    %649 = vmatpush1.xpose.msra.mxu0 0.0
    %650 = vmatprep.subr.mxu0 0.0
    %651 = vmatpush1.xpose.msra.mxu0 0.0
    %652 = vmatprep.subr.mxu0 0.0
    %653 = vmatpush1.xpose.msra.mxu0 0.0
    %654 = vmatprep.subr.mxu0 0.0
    %655 = vmatpush1.xpose.msra.mxu0 0.0
    %656 = vmatprep.subr.mxu0 0.0
    %657 = vmatpush1.xpose.msra.mxu0 0.0
    %658 = vmatprep.subr.mxu0 0.0
    %659 = vmatpush1.xpose.msra.mxu0 0.0
    %660 = vmatprep.subr.mxu0 0.0
    %661 = vmatpush1.xpose.msra.mxu0 0.0
    %662 = vmatprep.subr.mxu0 0.0
    %663 = vmatpush1.xpose.msra.mxu0 0.0
    %664 = vmatprep.subr.mxu0 0.0
    %665 = vmatpush1.xpose.msra.mxu0 0.0
    %666 = vmatprep.subr.mxu0 0.0
    %667 = vmatpush1.xpose.msra.mxu0 0.0
    %668 = vmatprep.subr.mxu0 0.0
    %669 = vmatpush1.xpose.msra.mxu0 0.0
    %670 = vmatprep.subr.mxu0 0.0
    %671 = vmatpush1.xpose.msra.mxu0 0.0
    %672 = vmatprep.subr.mxu0 0.0
    %673 = vmatpush1.xpose.msra.mxu0 0.0
    %674 = vmatprep.subr.mxu0 0.0
    %675 = vmatpush1.xpose.msra.mxu0 0.0
    %676 = vmatprep.subr.mxu0 0.0
    %677 = vmatpush1.xpose.msra.mxu0 0.0
    %678 = vmatprep.subr.mxu0 0.0
    %679 = vmatpush1.xpose.msra.mxu0 0.0
    %680 = vmatprep.subr.mxu0 0.0
    %681 = vmatpush1.xpose.msra.mxu0 0.0
    %682 = vmatprep.subr.mxu0 0.0
    %683 = vmatpush1.xpose.msra.mxu0 0.0
    %684 = vmatprep.subr.mxu0 0.0
    %685 = vmatpush1.xpose.msra.mxu0 0.0
    %686 = vmatprep.subr.mxu0 0.0
    %687 = vmatpush1.xpose.msra.mxu0 0.0
    %688 = vmatprep.subr.mxu0 0.0
    %689 = vmatpush1.xpose.msra.mxu0 0.0
    %690 = vmatprep.subr.mxu0 0.0
    %691 = vmatpush1.xpose.msra.mxu0 0.0
    %692 = vmatprep.subr.mxu0 0.0
    %693 = vmatpush1.xpose.msra.mxu0 0.0
    %694 = vmatprep.subr.mxu0 0.0
    %695 = vmatpush1.xpose.msra.mxu0 0.0
    %696 = vmatprep.subr.mxu0 0.0
    %697 = vmatpush1.xpose.msra.mxu0 0.0
    %698 = vmatprep.subr.mxu0 0.0
    %699 = vmatpush1.xpose.msra.mxu0 0.0
    %700 = vmatprep.subr.mxu0 0.0
    %701 = vmatpush1.xpose.msra.mxu0 0.0
    %702 = vmatprep.subr.mxu0 0.0
    %703 = vmatpush1.xpose.msra.mxu0 0.0
    %704 = vmatprep.subr.mxu0 0.0
    %705 = vmatpush1.xpose.msra.mxu0 0.0
    %706 = vmatprep.subr.mxu0 0.0
    %707 = vmatpush1.xpose.msra.mxu0 0.0
    %708 = vmatprep.mubr.f32.mxu0 0.0
    %709 = vmatmul.mubr.f32.gmra.mrb[0].mxu0 %v147
    %v710 = vpop.f32.mrb[0].mxu0
    %v711 = vadd.f32 0.0, %v710
    %v712 = vpop.f32.mrb[0].mxu0
    %713 = vmatprep.mubr.f32.mxu0 0.0
    %714 = vmatmul.mubr.f32.gmra.mrb[0].mxu0 %v150
    %v715 = vpop.f32.mrb[0].mxu0
    %v716 = vadd.f32 0.0, %v715
    %v717 = vpop.f32.mrb[0].mxu0
    %718 = vdwg.mxu0
    %v720 = vsel %vm74, %v128, 0
    %v723 = vsel %vm74, %v129, 0
    %725 = vmatprep.subr.mxu0 0.0
    %726 = vmatpush1.xpose.msra.mxu0 %v720
    %727 = vmatprep.subr.mxu0 0.0
    %728 = vmatpush1.xpose.msra.mxu0 %v723
    %729 = vmatprep.subr.mxu0 0.0
    %730 = vmatpush1.xpose.msra.mxu0 0.0
    %731 = vmatprep.subr.mxu0 0.0
    %732 = vmatpush1.xpose.msra.mxu0 0.0
    %733 = vmatprep.subr.mxu0 0.0
    %734 = vmatpush1.xpose.msra.mxu0 0.0
    %735 = vmatprep.subr.mxu0 0.0
    %736 = vmatpush1.xpose.msra.mxu0 0.0
    %737 = vmatprep.subr.mxu0 0.0
    %738 = vmatpush1.xpose.msra.mxu0 0.0
    %739 = vmatprep.subr.mxu0 0.0
    %740 = vmatpush1.xpose.msra.mxu0 0.0
    %741 = vmatprep.subr.mxu0 0.0
    %742 = vmatpush1.xpose.msra.mxu0 0.0
    %743 = vmatprep.subr.mxu0 0.0
    %744 = vmatpush1.xpose.msra.mxu0 0.0
    %745 = vmatprep.subr.mxu0 0.0
    %746 = vmatpush1.xpose.msra.mxu0 0.0
    %747 = vmatprep.subr.mxu0 0.0
    %748 = vmatpush1.xpose.msra.mxu0 0.0
    %749 = vmatprep.subr.mxu0 0.0
    %750 = vmatpush1.xpose.msra.mxu0 0.0
    %751 = vmatprep.subr.mxu0 0.0
    %752 = vmatpush1.xpose.msra.mxu0 0.0
    %753 = vmatprep.subr.mxu0 0.0
    %754 = vmatpush1.xpose.msra.mxu0 0.0
    %755 = vmatprep.subr.mxu0 0.0
    %756 = vmatpush1.xpose.msra.mxu0 0.0
    %757 = vmatprep.subr.mxu0 0.0
    %758 = vmatpush1.xpose.msra.mxu0 0.0
    %759 = vmatprep.subr.mxu0 0.0
    %760 = vmatpush1.xpose.msra.mxu0 0.0
    %761 = vmatprep.subr.mxu0 0.0
    %762 = vmatpush1.xpose.msra.mxu0 0.0
    %763 = vmatprep.subr.mxu0 0.0
    %764 = vmatpush1.xpose.msra.mxu0 0.0
    %765 = vmatprep.subr.mxu0 0.0
    %766 = vmatpush1.xpose.msra.mxu0 0.0
    %767 = vmatprep.subr.mxu0 0.0
    %768 = vmatpush1.xpose.msra.mxu0 0.0
    %769 = vmatprep.subr.mxu0 0.0
    %770 = vmatpush1.xpose.msra.mxu0 0.0
    %771 = vmatprep.subr.mxu0 0.0
    %772 = vmatpush1.xpose.msra.mxu0 0.0
    %773 = vmatprep.subr.mxu0 0.0
    %774 = vmatpush1.xpose.msra.mxu0 0.0
    %775 = vmatprep.subr.mxu0 0.0
    %776 = vmatpush1.xpose.msra.mxu0 0.0
    %777 = vmatprep.subr.mxu0 0.0
    %778 = vmatpush1.xpose.msra.mxu0 0.0
    %779 = vmatprep.subr.mxu0 0.0
    %780 = vmatpush1.xpose.msra.mxu0 0.0
    %781 = vmatprep.subr.mxu0 0.0
    %782 = vmatpush1.xpose.msra.mxu0 0.0
    %783 = vmatprep.subr.mxu0 0.0
    %784 = vmatpush1.xpose.msra.mxu0 0.0
    %785 = vmatprep.subr.mxu0 0.0
    %786 = vmatpush1.xpose.msra.mxu0 0.0
    %787 = vmatprep.subr.mxu0 0.0
    %788 = vmatpush1.xpose.msra.mxu0 0.0
    %789 = vmatprep.mubr.f32.mxu0 0.0
    %790 = vmatmul.mubr.f32.gmra.mrb[0].mxu0 %v147
    %v791 = vpop.f32.mrb[0].mxu0
    %v792 = vadd.f32 0.0, %v791
    %v793 = vpop.f32.mrb[0].mxu0
    %794 = vmatprep.mubr.f32.mxu0 0.0
    %795 = vmatmul.mubr.f32.gmra.mrb[0].mxu0 %v150
    %v796 = vpop.f32.mrb[0].mxu0
    %v797 = vadd.f32 0.0, %v796
    %v798 = vpop.f32.mrb[0].mxu0
    %799 = vdwg.mxu0
    %v801 = vsel %vm74, %v130, 0
    %v804 = vsel %vm74, %v131, 0
    %806 = vmatprep.subr.mxu0 0.0
    %807 = vmatpush1.xpose.msra.mxu0 %v801
    %808 = vmatprep.subr.mxu0 0.0
    %809 = vmatpush1.xpose.msra.mxu0 %v804
    %810 = vmatprep.subr.mxu0 0.0
    %811 = vmatpush1.xpose.msra.mxu0 0.0
    %812 = vmatprep.subr.mxu0 0.0
    %813 = vmatpush1.xpose.msra.mxu0 0.0
    %814 = vmatprep.subr.mxu0 0.0
    %815 = vmatpush1.xpose.msra.mxu0 0.0
    %816 = vmatprep.subr.mxu0 0.0
    %817 = vmatpush1.xpose.msra.mxu0 0.0
    %818 = vmatprep.subr.mxu0 0.0
    %819 = vmatpush1.xpose.msra.mxu0 0.0
    %820 = vmatprep.subr.mxu0 0.0
    %821 = vmatpush1.xpose.msra.mxu0 0.0
    %822 = vmatprep.subr.mxu0 0.0
    %823 = vmatpush1.xpose.msra.mxu0 0.0
    %824 = vmatprep.subr.mxu0 0.0
    %825 = vmatpush1.xpose.msra.mxu0 0.0
    %826 = vmatprep.subr.mxu0 0.0
    %827 = vmatpush1.xpose.msra.mxu0 0.0
    %828 = vmatprep.subr.mxu0 0.0
    %829 = vmatpush1.xpose.msra.mxu0 0.0
    %830 = vmatprep.subr.mxu0 0.0
    %831 = vmatpush1.xpose.msra.mxu0 0.0
    %832 = vmatprep.subr.mxu0 0.0
    %833 = vmatpush1.xpose.msra.mxu0 0.0
    %834 = vmatprep.subr.mxu0 0.0
    %835 = vmatpush1.xpose.msra.mxu0 0.0
    %836 = vmatprep.subr.mxu0 0.0
    %837 = vmatpush1.xpose.msra.mxu0 0.0
    %838 = vmatprep.subr.mxu0 0.0
    %839 = vmatpush1.xpose.msra.mxu0 0.0
    %840 = vmatprep.subr.mxu0 0.0
    %841 = vmatpush1.xpose.msra.mxu0 0.0
    %842 = vmatprep.subr.mxu0 0.0
    %843 = vmatpush1.xpose.msra.mxu0 0.0
    %844 = vmatprep.subr.mxu0 0.0
    %845 = vmatpush1.xpose.msra.mxu0 0.0
    %846 = vmatprep.subr.mxu0 0.0
    %847 = vmatpush1.xpose.msra.mxu0 0.0
    %848 = vmatprep.subr.mxu0 0.0
    %849 = vmatpush1.xpose.msra.mxu0 0.0
    %850 = vmatprep.subr.mxu0 0.0
    %851 = vmatpush1.xpose.msra.mxu0 0.0
    %852 = vmatprep.subr.mxu0 0.0
    %853 = vmatpush1.xpose.msra.mxu0 0.0
    %854 = vmatprep.subr.mxu0 0.0
    %855 = vmatpush1.xpose.msra.mxu0 0.0
    %856 = vmatprep.subr.mxu0 0.0
    %857 = vmatpush1.xpose.msra.mxu0 0.0
    %858 = vmatprep.subr.mxu0 0.0
    %859 = vmatpush1.xpose.msra.mxu0 0.0
    %860 = vmatprep.subr.mxu0 0.0
    %861 = vmatpush1.xpose.msra.mxu0 0.0
    %862 = vmatprep.subr.mxu0 0.0
    %863 = vmatpush1.xpose.msra.mxu0 0.0
    %864 = vmatprep.subr.mxu0 0.0
    %865 = vmatpush1.xpose.msra.mxu0 0.0
    %866 = vmatprep.subr.mxu0 0.0
    %867 = vmatpush1.xpose.msra.mxu0 0.0
    %868 = vmatprep.subr.mxu0 0.0
    %869 = vmatpush1.xpose.msra.mxu0 0.0
    %870 = vmatprep.mubr.f32.mxu0 0.0
    %871 = vmatmul.mubr.f32.gmra.mrb[0].mxu0 %v147
    %v872 = vpop.f32.mrb[0].mxu0
    %v873 = vadd.f32 0.0, %v872
    %v874 = vpop.f32.mrb[0].mxu0
    %875 = vmatprep.mubr.f32.mxu0 0.0
    %876 = vmatmul.mubr.f32.gmra.mrb[0].mxu0 %v150
    %v877 = vpop.f32.mrb[0].mxu0
    %v878 = vadd.f32 0.0, %v877
    %v879 = vpop.f32.mrb[0].mxu0
    %880 = vdwg.mxu0
    %v882 = vsel %vm74, %v132, 0
    %v885 = vsel %vm74, %v133, 0
    %887 = vmatprep.subr.mxu0 0.0
    %888 = vmatpush1.xpose.msra.mxu0 %v882
    %889 = vmatprep.subr.mxu0 0.0
    %890 = vmatpush1.xpose.msra.mxu0 %v885
    %891 = vmatprep.subr.mxu0 0.0
    %892 = vmatpush1.xpose.msra.mxu0 0.0
    %893 = vmatprep.subr.mxu0 0.0
    %894 = vmatpush1.xpose.msra.mxu0 0.0
    %895 = vmatprep.subr.mxu0 0.0
    %896 = vmatpush1.xpose.msra.mxu0 0.0
    %897 = vmatprep.subr.mxu0 0.0
    %898 = vmatpush1.xpose.msra.mxu0 0.0
    %899 = vmatprep.subr.mxu0 0.0
    %900 = vmatpush1.xpose.msra.mxu0 0.0
    %901 = vmatprep.subr.mxu0 0.0
    %902 = vmatpush1.xpose.msra.mxu0 0.0
    %903 = vmatprep.subr.mxu0 0.0
    %904 = vmatpush1.xpose.msra.mxu0 0.0
    %905 = vmatprep.subr.mxu0 0.0
    %906 = vmatpush1.xpose.msra.mxu0 0.0
    %907 = vmatprep.subr.mxu0 0.0
    %908 = vmatpush1.xpose.msra.mxu0 0.0
    %909 = vmatprep.subr.mxu0 0.0
    %910 = vmatpush1.xpose.msra.mxu0 0.0
    %911 = vmatprep.subr.mxu0 0.0
    %912 = vmatpush1.xpose.msra.mxu0 0.0
    %913 = vmatprep.subr.mxu0 0.0
    %914 = vmatpush1.xpose.msra.mxu0 0.0
    %915 = vmatprep.subr.mxu0 0.0
    %916 = vmatpush1.xpose.msra.mxu0 0.0
    %917 = vmatprep.subr.mxu0 0.0
    %918 = vmatpush1.xpose.msra.mxu0 0.0
    %919 = vmatprep.subr.mxu0 0.0
    %920 = vmatpush1.xpose.msra.mxu0 0.0
    %921 = vmatprep.subr.mxu0 0.0
    %922 = vmatpush1.xpose.msra.mxu0 0.0
    %923 = vmatprep.subr.mxu0 0.0
    %924 = vmatpush1.xpose.msra.mxu0 0.0
    %925 = vmatprep.subr.mxu0 0.0
    %926 = vmatpush1.xpose.msra.mxu0 0.0
    %927 = vmatprep.subr.mxu0 0.0
    %928 = vmatpush1.xpose.msra.mxu0 0.0
    %929 = vmatprep.subr.mxu0 0.0
    %930 = vmatpush1.xpose.msra.mxu0 0.0
    %931 = vmatprep.subr.mxu0 0.0
    %932 = vmatpush1.xpose.msra.mxu0 0.0
    %933 = vmatprep.subr.mxu0 0.0
    %934 = vmatpush1.xpose.msra.mxu0 0.0
    %935 = vmatprep.subr.mxu0 0.0
    %936 = vmatpush1.xpose.msra.mxu0 0.0
    %937 = vmatprep.subr.mxu0 0.0
    %938 = vmatpush1.xpose.msra.mxu0 0.0
    %939 = vmatprep.subr.mxu0 0.0
    %940 = vmatpush1.xpose.msra.mxu0 0.0
    %941 = vmatprep.subr.mxu0 0.0
    %942 = vmatpush1.xpose.msra.mxu0 0.0
    %943 = vmatprep.subr.mxu0 0.0
    %944 = vmatpush1.xpose.msra.mxu0 0.0
    %945 = vmatprep.subr.mxu0 0.0
    %946 = vmatpush1.xpose.msra.mxu0 0.0
    %947 = vmatprep.subr.mxu0 0.0
    %948 = vmatpush1.xpose.msra.mxu0 0.0
    %949 = vmatprep.subr.mxu0 0.0
    %950 = vmatpush1.xpose.msra.mxu0 0.0
    %951 = vmatprep.mubr.f32.mxu0 0.0
    %952 = vmatmul.mubr.f32.gmra.mrb[0].mxu0 %v147
    %v953 = vpop.f32.mrb[0].mxu0
    %v954 = vadd.f32 0.0, %v953
    %v955 = vpop.f32.mrb[0].mxu0
    %956 = vmatprep.mubr.f32.mxu0 0.0
    %957 = vmatmul.mubr.f32.gmra.mrb[0].mxu0 %v150
    %v958 = vpop.f32.mrb[0].mxu0
    %v959 = vadd.f32 0.0, %v958
    %v960 = vpop.f32.mrb[0].mxu0
    %961 = vdwg.mxu0
    %v963 = vsel %vm74, %v134, 0
    %v966 = vsel %vm74, %v135, 0
    %968 = vmatprep.subr.mxu0 0.0
    %969 = vmatpush1.xpose.msra.mxu0 %v963
    %970 = vmatprep.subr.mxu0 0.0
    %971 = vmatpush1.xpose.msra.mxu0 %v966
    %972 = vmatprep.subr.mxu0 0.0
    %973 = vmatpush1.xpose.msra.mxu0 0.0
    %974 = vmatprep.subr.mxu0 0.0
    %975 = vmatpush1.xpose.msra.mxu0 0.0
    %976 = vmatprep.subr.mxu0 0.0
    %977 = vmatpush1.xpose.msra.mxu0 0.0
    %978 = vmatprep.subr.mxu0 0.0
    %979 = vmatpush1.xpose.msra.mxu0 0.0
    %980 = vmatprep.subr.mxu0 0.0
    %981 = vmatpush1.xpose.msra.mxu0 0.0
    %982 = vmatprep.subr.mxu0 0.0
    %983 = vmatpush1.xpose.msra.mxu0 0.0
    %984 = vmatprep.subr.mxu0 0.0
    %985 = vmatpush1.xpose.msra.mxu0 0.0
    %986 = vmatprep.subr.mxu0 0.0
    %987 = vmatpush1.xpose.msra.mxu0 0.0
    %988 = vmatprep.subr.mxu0 0.0
    %989 = vmatpush1.xpose.msra.mxu0 0.0
    %990 = vmatprep.subr.mxu0 0.0
    %991 = vmatpush1.xpose.msra.mxu0 0.0
    %992 = vmatprep.subr.mxu0 0.0
    %993 = vmatpush1.xpose.msra.mxu0 0.0
    %994 = vmatprep.subr.mxu0 0.0
    %995 = vmatpush1.xpose.msra.mxu0 0.0
    %996 = vmatprep.subr.mxu0 0.0
    %997 = vmatpush1.xpose.msra.mxu0 0.0
    %998 = vmatprep.subr.mxu0 0.0
    %999 = vmatpush1.xpose.msra.mxu0 0.0
    %1000 = vmatprep.subr.mxu0 0.0
    %1001 = vmatpush1.xpose.msra.mxu0 0.0
    %1002 = vmatprep.subr.mxu0 0.0
    %1003 = vmatpush1.xpose.msra.mxu0 0.0
    %1004 = vmatprep.subr.mxu0 0.0
    %1005 = vmatpush1.xpose.msra.mxu0 0.0
    %1006 = vmatprep.subr.mxu0 0.0
    %1007 = vmatpush1.xpose.msra.mxu0 0.0
    %1008 = vmatprep.subr.mxu0 0.0
    %1009 = vmatpush1.xpose.msra.mxu0 0.0
    %1010 = vmatprep.subr.mxu0 0.0
    %1011 = vmatpush1.xpose.msra.mxu0 0.0
    %1012 = vmatprep.subr.mxu0 0.0
    %1013 = vmatpush1.xpose.msra.mxu0 0.0
    %1014 = vmatprep.subr.mxu0 0.0
    %1015 = vmatpush1.xpose.msra.mxu0 0.0
    %1016 = vmatprep.subr.mxu0 0.0
    %1017 = vmatpush1.xpose.msra.mxu0 0.0
    %1018 = vmatprep.subr.mxu0 0.0
    %1019 = vmatpush1.xpose.msra.mxu0 0.0
    %1020 = vmatprep.subr.mxu0 0.0
    %1021 = vmatpush1.xpose.msra.mxu0 0.0
    %1022 = vmatprep.subr.mxu0 0.0
    %1023 = vmatpush1.xpose.msra.mxu0 0.0
    %1024 = vmatprep.subr.mxu0 0.0
    %1025 = vmatpush1.xpose.msra.mxu0 0.0
    %1026 = vmatprep.subr.mxu0 0.0
    %1027 = vmatpush1.xpose.msra.mxu0 0.0
    %1028 = vmatprep.subr.mxu0 0.0
    %1029 = vmatpush1.xpose.msra.mxu0 0.0
    %1030 = vmatprep.subr.mxu0 0.0
    %1031 = vmatpush1.xpose.msra.mxu0 0.0
    %1032 = vmatprep.mubr.f32.mxu0 0.0
    %1033 = vmatmul.mubr.f32.gmra.mrb[0].mxu0 %v147
    %v1034 = vpop.f32.mrb[0].mxu0
    %v1035 = vadd.f32 0.0, %v1034
    %v1036 = vpop.f32.mrb[0].mxu0
    %1037 = vmatprep.mubr.f32.mxu0 0.0
    %1038 = vmatmul.mubr.f32.gmra.mrb[0].mxu0 %v150
    %v1039 = vpop.f32.mrb[0].mxu0
    %v1040 = vadd.f32 0.0, %v1039
    %v1041 = vpop.f32.mrb[0].mxu0
    %1042 = vdwg.mxu0
    %v1044 = vsel %vm74, %v136, 0
    %v1047 = vsel %vm74, %v137, 0
    %1049 = vmatprep.subr.mxu0 0.0
    %1050 = vmatpush1.xpose.msra.mxu0 %v1044
    %1051 = vmatprep.subr.mxu0 0.0
    %1052 = vmatpush1.xpose.msra.mxu0 %v1047
    %1053 = vmatprep.subr.mxu0 0.0
    %1054 = vmatpush1.xpose.msra.mxu0 0.0
    %1055 = vmatprep.subr.mxu0 0.0
    %1056 = vmatpush1.xpose.msra.mxu0 0.0
    %1057 = vmatprep.subr.mxu0 0.0
    %1058 = vmatpush1.xpose.msra.mxu0 0.0
    %1059 = vmatprep.subr.mxu0 0.0
    %1060 = vmatpush1.xpose.msra.mxu0 0.0
    %1061 = vmatprep.subr.mxu0 0.0
    %1062 = vmatpush1.xpose.msra.mxu0 0.0
    %1063 = vmatprep.subr.mxu0 0.0
    %1064 = vmatpush1.xpose.msra.mxu0 0.0
    %1065 = vmatprep.subr.mxu0 0.0
    %1066 = vmatpush1.xpose.msra.mxu0 0.0
    %1067 = vmatprep.subr.mxu0 0.0
    %1068 = vmatpush1.xpose.msra.mxu0 0.0
    %1069 = vmatprep.subr.mxu0 0.0
    %1070 = vmatpush1.xpose.msra.mxu0 0.0
    %1071 = vmatprep.subr.mxu0 0.0
    %1072 = vmatpush1.xpose.msra.mxu0 0.0
    %1073 = vmatprep.subr.mxu0 0.0
    %1074 = vmatpush1.xpose.msra.mxu0 0.0
    %1075 = vmatprep.subr.mxu0 0.0
    %1076 = vmatpush1.xpose.msra.mxu0 0.0
    %1077 = vmatprep.subr.mxu0 0.0
    %1078 = vmatpush1.xpose.msra.mxu0 0.0
    %1079 = vmatprep.subr.mxu0 0.0
    %1080 = vmatpush1.xpose.msra.mxu0 0.0
    %1081 = vmatprep.subr.mxu0 0.0
    %1082 = vmatpush1.xpose.msra.mxu0 0.0
    %1083 = vmatprep.subr.mxu0 0.0
    %1084 = vmatpush1.xpose.msra.mxu0 0.0
    %1085 = vmatprep.subr.mxu0 0.0
    %1086 = vmatpush1.xpose.msra.mxu0 0.0
    %1087 = vmatprep.subr.mxu0 0.0
    %1088 = vmatpush1.xpose.msra.mxu0 0.0
    %1089 = vmatprep.subr.mxu0 0.0
    %1090 = vmatpush1.xpose.msra.mxu0 0.0
    %1091 = vmatprep.subr.mxu0 0.0
    %1092 = vmatpush1.xpose.msra.mxu0 0.0
    %1093 = vmatprep.subr.mxu0 0.0
    %1094 = vmatpush1.xpose.msra.mxu0 0.0
    %1095 = vmatprep.subr.mxu0 0.0
    %1096 = vmatpush1.xpose.msra.mxu0 0.0
    %1097 = vmatprep.subr.mxu0 0.0
    %1098 = vmatpush1.xpose.msra.mxu0 0.0
    %1099 = vmatprep.subr.mxu0 0.0
    %1100 = vmatpush1.xpose.msra.mxu0 0.0
    %1101 = vmatprep.subr.mxu0 0.0
    %1102 = vmatpush1.xpose.msra.mxu0 0.0
    %1103 = vmatprep.subr.mxu0 0.0
    %1104 = vmatpush1.xpose.msra.mxu0 0.0
    %1105 = vmatprep.subr.mxu0 0.0
    %1106 = vmatpush1.xpose.msra.mxu0 0.0
    %1107 = vmatprep.subr.mxu0 0.0
    %1108 = vmatpush1.xpose.msra.mxu0 0.0
    %1109 = vmatprep.subr.mxu0 0.0
    %1110 = vmatpush1.xpose.msra.mxu0 0.0
    %1111 = vmatprep.subr.mxu0 0.0
    %1112 = vmatpush1.xpose.msra.mxu0 0.0
    %1113 = vmatprep.mubr.f32.mxu0 0.0
    %1114 = vmatmul.mubr.f32.gmra.mrb[0].mxu0 %v147
    %v1115 = vpop.f32.mrb[0].mxu0
    %v1116 = vadd.f32 0.0, %v1115
    %v1117 = vpop.f32.mrb[0].mxu0
    %1118 = vmatprep.mubr.f32.mxu0 0.0
    %1119 = vmatmul.mubr.f32.gmra.mrb[0].mxu0 %v150
    %v1120 = vpop.f32.mrb[0].mxu0
    %v1121 = vadd.f32 0.0, %v1120
    %v1122 = vpop.f32.mrb[0].mxu0
    %1123 = vdwg.mxu0
    %v1124 = vld [vmem:[#allocation8] sm:$0xff]
    %v1125 = vld [vmem:[#allocation8 + $0x8] sm:$0xff]
    %vm1126 = vcmask 130048
    %v1128 = vsel %vm1126, %v225, 0
    %v1131 = vsel %vm1126, %v230, 0
    %v1134 = vsel %vm1126, %v549, 0
    %v1137 = vsel %vm1126, %v554, 0
    %1139 = vmatprep.subr.mxu0 0.0
    %1140 = vmatpush1.xpose.msra.mxu0 %v1134
    %1141 = vmatprep.subr.mxu0 0.0
    %1142 = vmatpush1.xpose.msra.mxu0 %v1137
    %1143 = vmatprep.subr.mxu0 0.0
    %1144 = vmatpush1.xpose.msra.mxu0 0.0
    %1145 = vmatprep.subr.mxu0 0.0
    %1146 = vmatpush1.xpose.msra.mxu0 0.0
    %1147 = vmatprep.subr.mxu0 0.0
    %1148 = vmatpush1.xpose.msra.mxu0 0.0
    %1149 = vmatprep.subr.mxu0 0.0
    %1150 = vmatpush1.xpose.msra.mxu0 0.0
    %1151 = vmatprep.subr.mxu0 0.0
    %1152 = vmatpush1.xpose.msra.mxu0 0.0
    %1153 = vmatprep.subr.mxu0 0.0
    %1154 = vmatpush1.xpose.msra.mxu0 0.0
    %1155 = vmatprep.subr.mxu0 0.0
    %1156 = vmatpush1.xpose.msra.mxu0 0.0
    %1157 = vmatprep.subr.mxu0 0.0
    %1158 = vmatpush1.xpose.msra.mxu0 0.0
    %1159 = vmatprep.subr.mxu0 0.0
    %1160 = vmatpush1.xpose.msra.mxu0 0.0
    %1161 = vmatprep.subr.mxu0 0.0
    %1162 = vmatpush1.xpose.msra.mxu0 0.0
    %1163 = vmatprep.subr.mxu0 0.0
    %1164 = vmatpush1.xpose.msra.mxu0 0.0
    %1165 = vmatprep.subr.mxu0 0.0
    %1166 = vmatpush1.xpose.msra.mxu0 0.0
    %1167 = vmatprep.subr.mxu0 0.0
    %1168 = vmatpush1.xpose.msra.mxu0 0.0
    %1169 = vmatprep.subr.mxu0 0.0
    %1170 = vmatpush1.xpose.msra.mxu0 0.0
    %1171 = vmatprep.subr.mxu0 0.0
    %1172 = vmatpush1.xpose.msra.mxu0 0.0
    %1173 = vmatprep.subr.mxu0 0.0
    %1174 = vmatpush1.xpose.msra.mxu0 0.0
    %1175 = vmatprep.subr.mxu0 0.0
    %1176 = vmatpush1.xpose.msra.mxu0 0.0
    %1177 = vmatprep.subr.mxu0 0.0
    %1178 = vmatpush1.xpose.msra.mxu0 0.0
    %1179 = vmatprep.subr.mxu0 0.0
    %1180 = vmatpush1.xpose.msra.mxu0 0.0
    %1181 = vmatprep.subr.mxu0 0.0
    %1182 = vmatpush1.xpose.msra.mxu0 0.0
    %1183 = vmatprep.subr.mxu0 0.0
    %1184 = vmatpush1.xpose.msra.mxu0 0.0
    %1185 = vmatprep.subr.mxu0 0.0
    %1186 = vmatpush1.xpose.msra.mxu0 0.0
    %1187 = vmatprep.subr.mxu0 0.0
    %1188 = vmatpush1.xpose.msra.mxu0 0.0
    %1189 = vmatprep.subr.mxu0 0.0
    %1190 = vmatpush1.xpose.msra.mxu0 0.0
    %1191 = vmatprep.subr.mxu0 0.0
    %1192 = vmatpush1.xpose.msra.mxu0 0.0
    %1193 = vmatprep.subr.mxu0 0.0
    %1194 = vmatpush1.xpose.msra.mxu0 0.0
    %1195 = vmatprep.subr.mxu0 0.0
    %1196 = vmatpush1.xpose.msra.mxu0 0.0
    %1197 = vmatprep.subr.mxu0 0.0
    %1198 = vmatpush1.xpose.msra.mxu0 0.0
    %1199 = vmatprep.subr.mxu0 0.0
    %1200 = vmatpush1.xpose.msra.mxu0 0.0
    %1201 = vmatprep.subr.mxu0 0.0
    %1202 = vmatpush1.xpose.msra.mxu0 0.0
    %1203 = vmatprep.mubr.f32.mxu0 0.0
    %1204 = vmatmul.mubr.f32.gmra.mrb[0].mxu0 %v1128
    %v1205 = vpop.f32.mrb[0].mxu0
    %v1206 = vadd.f32 %v1124, %v1205
    %v1207 = vpop.f32.mrb[0].mxu0
    %1208 = vmatprep.mubr.f32.mxu0 0.0
    %1209 = vmatmul.mubr.f32.gmra.mrb[0].mxu0 %v1131
    %v1210 = vpop.f32.mrb[0].mxu0
    %v1211 = vadd.f32 %v1125, %v1210
    %v1212 = vpop.f32.mrb[0].mxu0
    %1213 = vdwg.mxu0
    %v1215 = vsel %vm1126, %v306, 0
    %v1218 = vsel %vm1126, %v311, 0
    %v1221 = vsel %vm1126, %v630, 0
    %v1224 = vsel %vm1126, %v635, 0
    %1226 = vmatprep.subr.mxu0 0.0
    %1227 = vmatpush1.xpose.msra.mxu0 %v1221
    %1228 = vmatprep.subr.mxu0 0.0
    %1229 = vmatpush1.xpose.msra.mxu0 %v1224
    %1230 = vmatprep.subr.mxu0 0.0
    %1231 = vmatpush1.xpose.msra.mxu0 0.0
    %1232 = vmatprep.subr.mxu0 0.0
    %1233 = vmatpush1.xpose.msra.mxu0 0.0
    %1234 = vmatprep.subr.mxu0 0.0
    %1235 = vmatpush1.xpose.msra.mxu0 0.0
    %1236 = vmatprep.subr.mxu0 0.0
    %1237 = vmatpush1.xpose.msra.mxu0 0.0
    %1238 = vmatprep.subr.mxu0 0.0
    %1239 = vmatpush1.xpose.msra.mxu0 0.0
    %1240 = vmatprep.subr.mxu0 0.0
    %1241 = vmatpush1.xpose.msra.mxu0 0.0
    %1242 = vmatprep.subr.mxu0 0.0
    %1243 = vmatpush1.xpose.msra.mxu0 0.0
    %1244 = vmatprep.subr.mxu0 0.0
    %1245 = vmatpush1.xpose.msra.mxu0 0.0
    %1246 = vmatprep.subr.mxu0 0.0
    %1247 = vmatpush1.xpose.msra.mxu0 0.0
    %1248 = vmatprep.subr.mxu0 0.0
    %1249 = vmatpush1.xpose.msra.mxu0 0.0
    %1250 = vmatprep.subr.mxu0 0.0
    %1251 = vmatpush1.xpose.msra.mxu0 0.0
    %1252 = vmatprep.subr.mxu0 0.0
    %1253 = vmatpush1.xpose.msra.mxu0 0.0
    %1254 = vmatprep.subr.mxu0 0.0
    %1255 = vmatpush1.xpose.msra.mxu0 0.0
    %1256 = vmatprep.subr.mxu0 0.0
    %1257 = vmatpush1.xpose.msra.mxu0 0.0
    %1258 = vmatprep.subr.mxu0 0.0
    %1259 = vmatpush1.xpose.msra.mxu0 0.0
    %1260 = vmatprep.subr.mxu0 0.0
    %1261 = vmatpush1.xpose.msra.mxu0 0.0
    %1262 = vmatprep.subr.mxu0 0.0
    %1263 = vmatpush1.xpose.msra.mxu0 0.0
    %1264 = vmatprep.subr.mxu0 0.0
    %1265 = vmatpush1.xpose.msra.mxu0 0.0
    %1266 = vmatprep.subr.mxu0 0.0
    %1267 = vmatpush1.xpose.msra.mxu0 0.0
    %1268 = vmatprep.subr.mxu0 0.0
    %1269 = vmatpush1.xpose.msra.mxu0 0.0
    %1270 = vmatprep.subr.mxu0 0.0
    %1271 = vmatpush1.xpose.msra.mxu0 0.0
    %1272 = vmatprep.subr.mxu0 0.0
    %1273 = vmatpush1.xpose.msra.mxu0 0.0
    %1274 = vmatprep.subr.mxu0 0.0
    %1275 = vmatpush1.xpose.msra.mxu0 0.0
    %1276 = vmatprep.subr.mxu0 0.0
    %1277 = vmatpush1.xpose.msra.mxu0 0.0
    %1278 = vmatprep.subr.mxu0 0.0
    %1279 = vmatpush1.xpose.msra.mxu0 0.0
    %1280 = vmatprep.subr.mxu0 0.0
    %1281 = vmatpush1.xpose.msra.mxu0 0.0
    %1282 = vmatprep.subr.mxu0 0.0
    %1283 = vmatpush1.xpose.msra.mxu0 0.0
    %1284 = vmatprep.subr.mxu0 0.0
    %1285 = vmatpush1.xpose.msra.mxu0 0.0
    %1286 = vmatprep.subr.mxu0 0.0
    %1287 = vmatpush1.xpose.msra.mxu0 0.0
    %1288 = vmatprep.subr.mxu0 0.0
    %1289 = vmatpush1.xpose.msra.mxu0 0.0
    %1290 = vmatprep.mubr.f32.mxu0 0.0
    %1291 = vmatmul.mubr.f32.gmra.mrb[0].mxu0 %v1215
    %v1292 = vpop.f32.mrb[0].mxu0
    %v1293 = vadd.f32 %v1124, %v1292
    %v1294 = vpop.f32.mrb[0].mxu0
    %1295 = vmatprep.mubr.f32.mxu0 0.0
    %1296 = vmatmul.mubr.f32.gmra.mrb[0].mxu0 %v1218
    %v1297 = vpop.f32.mrb[0].mxu0
    %v1298 = vadd.f32 %v1125, %v1297
    %v1299 = vpop.f32.mrb[0].mxu0
    %1300 = vdwg.mxu0
    %v1302 = vsel %vm1126, %v387, 0
    %v1305 = vsel %vm1126, %v392, 0
    %v1308 = vsel %vm1126, %v711, 0
    %v1311 = vsel %vm1126, %v716, 0
    %1313 = vmatprep.subr.mxu0 0.0
    %1314 = vmatpush1.xpose.msra.mxu0 %v1308
    %1315 = vmatprep.subr.mxu0 0.0
    %1316 = vmatpush1.xpose.msra.mxu0 %v1311
    %1317 = vmatprep.subr.mxu0 0.0
    %1318 = vmatpush1.xpose.msra.mxu0 0.0
    %1319 = vmatprep.subr.mxu0 0.0
    %1320 = vmatpush1.xpose.msra.mxu0 0.0
    %1321 = vmatprep.subr.mxu0 0.0
    %1322 = vmatpush1.xpose.msra.mxu0 0.0
    %1323 = vmatprep.subr.mxu0 0.0
    %1324 = vmatpush1.xpose.msra.mxu0 0.0
    %1325 = vmatprep.subr.mxu0 0.0
    %1326 = vmatpush1.xpose.msra.mxu0 0.0
    %1327 = vmatprep.subr.mxu0 0.0
    %1328 = vmatpush1.xpose.msra.mxu0 0.0
    %1329 = vmatprep.subr.mxu0 0.0
    %1330 = vmatpush1.xpose.msra.mxu0 0.0
    %1331 = vmatprep.subr.mxu0 0.0
    %1332 = vmatpush1.xpose.msra.mxu0 0.0
    %1333 = vmatprep.subr.mxu0 0.0
    %1334 = vmatpush1.xpose.msra.mxu0 0.0
    %1335 = vmatprep.subr.mxu0 0.0
    %1336 = vmatpush1.xpose.msra.mxu0 0.0
    %1337 = vmatprep.subr.mxu0 0.0
    %1338 = vmatpush1.xpose.msra.mxu0 0.0
    %1339 = vmatprep.subr.mxu0 0.0
    %1340 = vmatpush1.xpose.msra.mxu0 0.0
    %1341 = vmatprep.subr.mxu0 0.0
    %1342 = vmatpush1.xpose.msra.mxu0 0.0
    %1343 = vmatprep.subr.mxu0 0.0
    %1344 = vmatpush1.xpose.msra.mxu0 0.0
    %1345 = vmatprep.subr.mxu0 0.0
    %1346 = vmatpush1.xpose.msra.mxu0 0.0
    %1347 = vmatprep.subr.mxu0 0.0
    %1348 = vmatpush1.xpose.msra.mxu0 0.0
    %1349 = vmatprep.subr.mxu0 0.0
    %1350 = vmatpush1.xpose.msra.mxu0 0.0
    %1351 = vmatprep.subr.mxu0 0.0
    %1352 = vmatpush1.xpose.msra.mxu0 0.0
    %1353 = vmatprep.subr.mxu0 0.0
    %1354 = vmatpush1.xpose.msra.mxu0 0.0
    %1355 = vmatprep.subr.mxu0 0.0
    %1356 = vmatpush1.xpose.msra.mxu0 0.0
    %1357 = vmatprep.subr.mxu0 0.0
    %1358 = vmatpush1.xpose.msra.mxu0 0.0
    %1359 = vmatprep.subr.mxu0 0.0
    %1360 = vmatpush1.xpose.msra.mxu0 0.0
    %1361 = vmatprep.subr.mxu0 0.0
    %1362 = vmatpush1.xpose.msra.mxu0 0.0
    %1363 = vmatprep.subr.mxu0 0.0
    %1364 = vmatpush1.xpose.msra.mxu0 0.0
    %1365 = vmatprep.subr.mxu0 0.0
    %1366 = vmatpush1.xpose.msra.mxu0 0.0
    %1367 = vmatprep.subr.mxu0 0.0
    %1368 = vmatpush1.xpose.msra.mxu0 0.0
    %1369 = vmatprep.subr.mxu0 0.0
    %1370 = vmatpush1.xpose.msra.mxu0 0.0
    %1371 = vmatprep.subr.mxu0 0.0
    %1372 = vmatpush1.xpose.msra.mxu0 0.0
    %1373 = vmatprep.subr.mxu0 0.0
    %1374 = vmatpush1.xpose.msra.mxu0 0.0
    %1375 = vmatprep.subr.mxu0 0.0
    %1376 = vmatpush1.xpose.msra.mxu0 0.0
    %1377 = vmatprep.mubr.f32.mxu0 0.0
    %1378 = vmatmul.mubr.f32.gmra.mrb[0].mxu0 %v1302
    %v1379 = vpop.f32.mrb[0].mxu0
    %v1380 = vadd.f32 %v1124, %v1379
    %v1381 = vpop.f32.mrb[0].mxu0
    %1382 = vmatprep.mubr.f32.mxu0 0.0
    %1383 = vmatmul.mubr.f32.gmra.mrb[0].mxu0 %v1305
    %v1384 = vpop.f32.mrb[0].mxu0
    %v1385 = vadd.f32 %v1125, %v1384
    %v1386 = vpop.f32.mrb[0].mxu0
    %1387 = vdwg.mxu0
    %v1389 = vsel %vm1126, %v468, 0
    %v1392 = vsel %vm1126, %v473, 0
    %v1395 = vsel %vm1126, %v792, 0
    %v1398 = vsel %vm1126, %v797, 0
    %1400 = vmatprep.subr.mxu0 0.0
    %1401 = vmatpush1.xpose.msra.mxu0 %v1395
    %1402 = vmatprep.subr.mxu0 0.0
    %1403 = vmatpush1.xpose.msra.mxu0 %v1398
    %1404 = vmatprep.subr.mxu0 0.0
    %1405 = vmatpush1.xpose.msra.mxu0 0.0
    %1406 = vmatprep.subr.mxu0 0.0
    %1407 = vmatpush1.xpose.msra.mxu0 0.0
    %1408 = vmatprep.subr.mxu0 0.0
    %1409 = vmatpush1.xpose.msra.mxu0 0.0
    %1410 = vmatprep.subr.mxu0 0.0
    %1411 = vmatpush1.xpose.msra.mxu0 0.0
    %1412 = vmatprep.subr.mxu0 0.0
    %1413 = vmatpush1.xpose.msra.mxu0 0.0
    %1414 = vmatprep.subr.mxu0 0.0
    %1415 = vmatpush1.xpose.msra.mxu0 0.0
    %1416 = vmatprep.subr.mxu0 0.0
    %1417 = vmatpush1.xpose.msra.mxu0 0.0
    %1418 = vmatprep.subr.mxu0 0.0
    %1419 = vmatpush1.xpose.msra.mxu0 0.0
    %1420 = vmatprep.subr.mxu0 0.0
    %1421 = vmatpush1.xpose.msra.mxu0 0.0
    %1422 = vmatprep.subr.mxu0 0.0
    %1423 = vmatpush1.xpose.msra.mxu0 0.0
    %1424 = vmatprep.subr.mxu0 0.0
    %1425 = vmatpush1.xpose.msra.mxu0 0.0
    %1426 = vmatprep.subr.mxu0 0.0
    %1427 = vmatpush1.xpose.msra.mxu0 0.0
    %1428 = vmatprep.subr.mxu0 0.0
    %1429 = vmatpush1.xpose.msra.mxu0 0.0
    %1430 = vmatprep.subr.mxu0 0.0
    %1431 = vmatpush1.xpose.msra.mxu0 0.0
    %1432 = vmatprep.subr.mxu0 0.0
    %1433 = vmatpush1.xpose.msra.mxu0 0.0
    %1434 = vmatprep.subr.mxu0 0.0
    %1435 = vmatpush1.xpose.msra.mxu0 0.0
    %1436 = vmatprep.subr.mxu0 0.0
    %1437 = vmatpush1.xpose.msra.mxu0 0.0
    %1438 = vmatprep.subr.mxu0 0.0
    %1439 = vmatpush1.xpose.msra.mxu0 0.0
    %1440 = vmatprep.subr.mxu0 0.0
    %1441 = vmatpush1.xpose.msra.mxu0 0.0
    %1442 = vmatprep.subr.mxu0 0.0
    %1443 = vmatpush1.xpose.msra.mxu0 0.0
    %1444 = vmatprep.subr.mxu0 0.0
    %1445 = vmatpush1.xpose.msra.mxu0 0.0
    %1446 = vmatprep.subr.mxu0 0.0
    %1447 = vmatpush1.xpose.msra.mxu0 0.0
    %1448 = vmatprep.subr.mxu0 0.0
    %1449 = vmatpush1.xpose.msra.mxu0 0.0
    %1450 = vmatprep.subr.mxu0 0.0
    %1451 = vmatpush1.xpose.msra.mxu0 0.0
    %1452 = vmatprep.subr.mxu0 0.0
    %1453 = vmatpush1.xpose.msra.mxu0 0.0
    %1454 = vmatprep.subr.mxu0 0.0
    %1455 = vmatpush1.xpose.msra.mxu0 0.0
    %1456 = vmatprep.subr.mxu0 0.0
    %1457 = vmatpush1.xpose.msra.mxu0 0.0
    %1458 = vmatprep.subr.mxu0 0.0
    %1459 = vmatpush1.xpose.msra.mxu0 0.0
    %1460 = vmatprep.subr.mxu0 0.0
    %1461 = vmatpush1.xpose.msra.mxu0 0.0
    %1462 = vmatprep.subr.mxu0 0.0
    %1463 = vmatpush1.xpose.msra.mxu0 0.0
    %1464 = vmatprep.mubr.f32.mxu0 0.0
    %1465 = vmatmul.mubr.f32.gmra.mrb[0].mxu0 %v1389
    %v1466 = vpop.f32.mrb[0].mxu0
    %v1467 = vadd.f32 %v1124, %v1466
    %v1468 = vpop.f32.mrb[0].mxu0
    %1469 = vmatprep.mubr.f32.mxu0 0.0
    %1470 = vmatmul.mubr.f32.gmra.mrb[0].mxu0 %v1392
    %v1471 = vpop.f32.mrb[0].mxu0
    %v1472 = vadd.f32 %v1125, %v1471
    %v1473 = vpop.f32.mrb[0].mxu0
    %1474 = vdwg.mxu0
    %v1475 = vsel %vm1126, %v1206, -inf
    %1476 = vmax.xlane.f32.xlu0 %v1475
    %v1477 = vpop.xlane.xlu0 %1476
    %v1478 = vsel %vm1126, %v1211, -inf
    %1479 = vmax.xlane.f32.xlu0 %v1478
    %v1480 = vpop.xlane.xlu0 %1479
    %v1481 = vsel %vm1126, %v1293, -inf
    %1482 = vmax.xlane.f32.xlu0 %v1481
    %v1483 = vpop.xlane.xlu0 %1482
    %v1484 = vsel %vm1126, %v1298, -inf
    %1485 = vmax.xlane.f32.xlu0 %v1484
    %v1486 = vpop.xlane.xlu0 %1485
    %v1487 = vsel %vm1126, %v1380, -inf
    %1488 = vmax.xlane.f32.xlu0 %v1487
    %v1489 = vpop.xlane.xlu0 %1488
    %v1490 = vsel %vm1126, %v1385, -inf
    %1491 = vmax.xlane.f32.xlu0 %v1490
    %v1492 = vpop.xlane.xlu0 %1491
    %v1493 = vsel %vm1126, %v1467, -inf
    %1494 = vmax.xlane.f32.xlu0 %v1493
    %v1495 = vpop.xlane.xlu0 %1494
    %v1496 = vsel %vm1126, %v1472, -inf
    %1497 = vmax.xlane.f32.xlu0 %v1496
    %v1498 = vpop.xlane.xlu0 %1497
    %v1499 = vsub.f32 %v1206, %v1477
    %v1500 = vsub.f32 %v1211, %v1480
    %v1501 = vsub.f32 %v1293, %v1483
    %v1502 = vsub.f32 %v1298, %v1486
    %v1503 = vsub.f32 %v1380, %v1489
    %v1504 = vsub.f32 %v1385, %v1492
    %v1505 = vsub.f32 %v1467, %v1495
    %v1506 = vsub.f32 %v1472, %v1498
    %v1507 = vmul.f32 %v1499, 1.442695
    %v1508 = vpow.pop %v1507
    %v1509 = vmul.f32 %v1500, 1.442695
    %v1510 = vpow.pop %v1509
    %v1511 = vmul.f32 %v1501, 1.442695
    %v1512 = vpow.pop %v1511
    %v1513 = vmul.f32 %v1502, 1.442695
    %v1514 = vpow.pop %v1513
    %v1515 = vmul.f32 %v1503, 1.442695
    %v1516 = vpow.pop %v1515
    %v1517 = vmul.f32 %v1504, 1.442695
    %v1518 = vpow.pop %v1517
    %v1519 = vmul.f32 %v1505, 1.442695
    %v1520 = vpow.pop %v1519
    %v1521 = vmul.f32 %v1506, 1.442695
    %v1522 = vpow.pop %v1521
    %v1523 = vsel %vm1126, %v1508, 0.0
    %1524 = vadd.xlane.f32.xlu0 %v1523
    %v1525 = vpop.xlane.xlu0 %1524
    %v1526 = vsel %vm1126, %v1510, 0.0
    %1527 = vadd.xlane.f32.xlu0 %v1526
    %v1528 = vpop.xlane.xlu0 %1527
    %v1529 = vsel %vm1126, %v1512, 0.0
    %1530 = vadd.xlane.f32.xlu0 %v1529
    %v1531 = vpop.xlane.xlu0 %1530
    %v1532 = vsel %vm1126, %v1514, 0.0
    %1533 = vadd.xlane.f32.xlu0 %v1532
    %v1534 = vpop.xlane.xlu0 %1533
    %v1535 = vsel %vm1126, %v1516, 0.0
    %1536 = vadd.xlane.f32.xlu0 %v1535
    %v1537 = vpop.xlane.xlu0 %1536
    %v1538 = vsel %vm1126, %v1518, 0.0
    %1539 = vadd.xlane.f32.xlu0 %v1538
    %v1540 = vpop.xlane.xlu0 %1539
    %v1541 = vsel %vm1126, %v1520, 0.0
    %1542 = vadd.xlane.f32.xlu0 %v1541
    %v1543 = vpop.xlane.xlu0 %1542
    %v1544 = vsel %vm1126, %v1522, 0.0
    %1545 = vadd.xlane.f32.xlu0 %v1544
    %v1546 = vpop.xlane.xlu0 %1545
    %v1547 = vrcp.pop %v1525
    %v1548 = vrcp.pop %v1528
    %v1549 = vrcp.pop %v1531
    %v1550 = vrcp.pop %v1534
    %v1551 = vrcp.pop %v1537
    %v1552 = vrcp.pop %v1540
    %v1553 = vrcp.pop %v1543
    %v1554 = vrcp.pop %v1546
    %v1555 = vmul.f32 %v1525, %v1547
    %v1556 = vmul.f32 %v1528, %v1548
    %v1557 = vmul.f32 %v1531, %v1549
    %v1558 = vmul.f32 %v1534, %v1550
    %v1559 = vmul.f32 %v1537, %v1551
    %v1560 = vmul.f32 %v1540, %v1552
    %v1561 = vmul.f32 %v1543, %v1553
    %v1562 = vmul.f32 %v1546, %v1554
    %v1563 = vsub.f32 2.0, %v1555
    %v1564 = vsub.f32 2.0, %v1556
    %v1565 = vsub.f32 2.0, %v1557
    %v1566 = vsub.f32 2.0, %v1558
    %v1567 = vsub.f32 2.0, %v1559
    %v1568 = vsub.f32 2.0, %v1560
    %v1569 = vsub.f32 2.0, %v1561
    %v1570 = vsub.f32 2.0, %v1562
    %v1571 = vmul.f32 %v1547, %v1563
    %v1572 = vmul.f32 %v1548, %v1564
    %v1573 = vmul.f32 %v1549, %v1565
    %v1574 = vmul.f32 %v1550, %v1566
    %v1575 = vmul.f32 %v1551, %v1567
    %v1576 = vmul.f32 %v1552, %v1568
    %v1577 = vmul.f32 %v1553, %v1569
    %v1578 = vmul.f32 %v1554, %v1570
    %v1579 = vmul.f32 %v1508, %v1571
    %v1580 = vmul.f32 %v1510, %v1572
    %v1581 = vmul.f32 %v1512, %v1573
    %v1582 = vmul.f32 %v1514, %v1574
    %v1583 = vmul.f32 %v1516, %v1575
    %v1584 = vmul.f32 %v1518, %v1576
    %v1585 = vmul.f32 %v1520, %v1577
    %v1586 = vmul.f32 %v1522, %v1578
    %v1588 = vsel %vm1126, %v1579, 0
    %v1591 = vsel %vm1126, %v1580, 0
    %1593 = vmatprep.subr.mxu0 0.0
    %1594 = vmatpush1.msra.mxu0 %v873
    %1595 = vmatprep.subr.mxu0 0.0
    %1596 = vmatpush1.msra.mxu0 %v878
    %1597 = vmatprep.subr.mxu0 0.0
    %1598 = vmatpush1.msra.mxu0 0.0
    %1599 = vmatprep.subr.mxu0 0.0
    %1600 = vmatpush1.msra.mxu0 0.0
    %1601 = vmatprep.subr.mxu0 0.0
    %1602 = vmatpush1.msra.mxu0 0.0
    %1603 = vmatprep.subr.mxu0 0.0
    %1604 = vmatpush1.msra.mxu0 0.0
    %1605 = vmatprep.subr.mxu0 0.0
    %1606 = vmatpush1.msra.mxu0 0.0
    %1607 = vmatprep.subr.mxu0 0.0
    %1608 = vmatpush1.msra.mxu0 0.0
    %1609 = vmatprep.subr.mxu0 0.0
    %1610 = vmatpush1.msra.mxu0 0.0
    %1611 = vmatprep.subr.mxu0 0.0
    %1612 = vmatpush1.msra.mxu0 0.0
    %1613 = vmatprep.subr.mxu0 0.0
    %1614 = vmatpush1.msra.mxu0 0.0
    %1615 = vmatprep.subr.mxu0 0.0
    %1616 = vmatpush1.msra.mxu0 0.0
    %1617 = vmatprep.subr.mxu0 0.0
    %1618 = vmatpush1.msra.mxu0 0.0
    %1619 = vmatprep.subr.mxu0 0.0
    %1620 = vmatpush1.msra.mxu0 0.0
    %1621 = vmatprep.subr.mxu0 0.0
    %1622 = vmatpush1.msra.mxu0 0.0
    %1623 = vmatprep.subr.mxu0 0.0
    %1624 = vmatpush1.msra.mxu0 0.0
    %1625 = vmatprep.subr.mxu0 0.0
    %1626 = vmatpush1.msra.mxu0 0.0
    %1627 = vmatprep.subr.mxu0 0.0
    %1628 = vmatpush1.msra.mxu0 0.0
    %1629 = vmatprep.subr.mxu0 0.0
    %1630 = vmatpush1.msra.mxu0 0.0
    %1631 = vmatprep.subr.mxu0 0.0
    %1632 = vmatpush1.msra.mxu0 0.0
    %1633 = vmatprep.subr.mxu0 0.0
    %1634 = vmatpush1.msra.mxu0 0.0
    %1635 = vmatprep.subr.mxu0 0.0
    %1636 = vmatpush1.msra.mxu0 0.0
    %1637 = vmatprep.subr.mxu0 0.0
    %1638 = vmatpush1.msra.mxu0 0.0
    %1639 = vmatprep.subr.mxu0 0.0
    %1640 = vmatpush1.msra.mxu0 0.0
    %1641 = vmatprep.subr.mxu0 0.0
    %1642 = vmatpush1.msra.mxu0 0.0
    %1643 = vmatprep.subr.mxu0 0.0
    %1644 = vmatpush1.msra.mxu0 0.0
    %1645 = vmatprep.subr.mxu0 0.0
    %1646 = vmatpush1.msra.mxu0 0.0
    %1647 = vmatprep.subr.mxu0 0.0
    %1648 = vmatpush1.msra.mxu0 0.0
    %1649 = vmatprep.subr.mxu0 0.0
    %1650 = vmatpush1.msra.mxu0 0.0
    %1651 = vmatprep.subr.mxu0 0.0
    %1652 = vmatpush1.msra.mxu0 0.0
    %1653 = vmatprep.subr.mxu0 0.0
    %1654 = vmatpush1.msra.mxu0 0.0
    %1655 = vmatprep.subr.mxu0 0.0
    %1656 = vmatpush1.msra.mxu0 0.0
    %1657 = vmatprep.mubr.f32.mxu0 0.0
    %1658 = vmatmul.mubr.f32.gmra.mrb[0].mxu0 %v1588
    %v1659 = vpop.f32.mrb[0].mxu0
    %v1660 = vadd.f32 0.0, %v1659
    %v1661 = vpop.f32.mrb[0].mxu0
    %1662 = vmatprep.mubr.f32.mxu0 0.0
    %1663 = vmatmul.mubr.f32.gmra.mrb[0].mxu0 %v1591
    %v1664 = vpop.f32.mrb[0].mxu0
    %v1665 = vadd.f32 0.0, %v1664
    %v1666 = vpop.f32.mrb[0].mxu0
    %1667 = vdwg.mxu0
    %v1669 = vsel %vm1126, %v1581, 0
    %v1672 = vsel %vm1126, %v1582, 0
    %1674 = vmatprep.subr.mxu0 0.0
    %1675 = vmatpush1.msra.mxu0 %v954
    %1676 = vmatprep.subr.mxu0 0.0
    %1677 = vmatpush1.msra.mxu0 %v959
    %1678 = vmatprep.subr.mxu0 0.0
    %1679 = vmatpush1.msra.mxu0 0.0
    %1680 = vmatprep.subr.mxu0 0.0
    %1681 = vmatpush1.msra.mxu0 0.0
    %1682 = vmatprep.subr.mxu0 0.0
    %1683 = vmatpush1.msra.mxu0 0.0
    %1684 = vmatprep.subr.mxu0 0.0
    %1685 = vmatpush1.msra.mxu0 0.0
    %1686 = vmatprep.subr.mxu0 0.0
    %1687 = vmatpush1.msra.mxu0 0.0
    %1688 = vmatprep.subr.mxu0 0.0
    %1689 = vmatpush1.msra.mxu0 0.0
    %1690 = vmatprep.subr.mxu0 0.0
    %1691 = vmatpush1.msra.mxu0 0.0
    %1692 = vmatprep.subr.mxu0 0.0
    %1693 = vmatpush1.msra.mxu0 0.0
    %1694 = vmatprep.subr.mxu0 0.0
    %1695 = vmatpush1.msra.mxu0 0.0
    %1696 = vmatprep.subr.mxu0 0.0
    %1697 = vmatpush1.msra.mxu0 0.0
    %1698 = vmatprep.subr.mxu0 0.0
    %1699 = vmatpush1.msra.mxu0 0.0
    %1700 = vmatprep.subr.mxu0 0.0
    %1701 = vmatpush1.msra.mxu0 0.0
    %1702 = vmatprep.subr.mxu0 0.0
    %1703 = vmatpush1.msra.mxu0 0.0
    %1704 = vmatprep.subr.mxu0 0.0
    %1705 = vmatpush1.msra.mxu0 0.0
    %1706 = vmatprep.subr.mxu0 0.0
    %1707 = vmatpush1.msra.mxu0 0.0
    %1708 = vmatprep.subr.mxu0 0.0
    %1709 = vmatpush1.msra.mxu0 0.0
    %1710 = vmatprep.subr.mxu0 0.0
    %1711 = vmatpush1.msra.mxu0 0.0
    %1712 = vmatprep.subr.mxu0 0.0
    %1713 = vmatpush1.msra.mxu0 0.0
    %1714 = vmatprep.subr.mxu0 0.0
    %1715 = vmatpush1.msra.mxu0 0.0
    %1716 = vmatprep.subr.mxu0 0.0
    %1717 = vmatpush1.msra.mxu0 0.0
    %1718 = vmatprep.subr.mxu0 0.0
    %1719 = vmatpush1.msra.mxu0 0.0
    %1720 = vmatprep.subr.mxu0 0.0
    %1721 = vmatpush1.msra.mxu0 0.0
    %1722 = vmatprep.subr.mxu0 0.0
    %1723 = vmatpush1.msra.mxu0 0.0
    %1724 = vmatprep.subr.mxu0 0.0
    %1725 = vmatpush1.msra.mxu0 0.0
    %1726 = vmatprep.subr.mxu0 0.0
    %1727 = vmatpush1.msra.mxu0 0.0
    %1728 = vmatprep.subr.mxu0 0.0
    %1729 = vmatpush1.msra.mxu0 0.0
    %1730 = vmatprep.subr.mxu0 0.0
    %1731 = vmatpush1.msra.mxu0 0.0
    %1732 = vmatprep.subr.mxu0 0.0
    %1733 = vmatpush1.msra.mxu0 0.0
    %1734 = vmatprep.subr.mxu0 0.0
    %1735 = vmatpush1.msra.mxu0 0.0
    %1736 = vmatprep.subr.mxu0 0.0
    %1737 = vmatpush1.msra.mxu0 0.0
    %1738 = vmatprep.mubr.f32.mxu0 0.0
    %1739 = vmatmul.mubr.f32.gmra.mrb[0].mxu0 %v1669
    %v1740 = vpop.f32.mrb[0].mxu0
    %v1741 = vadd.f32 0.0, %v1740
    %v1742 = vpop.f32.mrb[0].mxu0
    %1743 = vmatprep.mubr.f32.mxu0 0.0
    %1744 = vmatmul.mubr.f32.gmra.mrb[0].mxu0 %v1672
    %v1745 = vpop.f32.mrb[0].mxu0
    %v1746 = vadd.f32 0.0, %v1745
    %v1747 = vpop.f32.mrb[0].mxu0
    %1748 = vdwg.mxu0
    %v1750 = vsel %vm1126, %v1583, 0
    %v1753 = vsel %vm1126, %v1584, 0
    %1755 = vmatprep.subr.mxu0 0.0
    %1756 = vmatpush1.msra.mxu0 %v1035
    %1757 = vmatprep.subr.mxu0 0.0
    %1758 = vmatpush1.msra.mxu0 %v1040
    %1759 = vmatprep.subr.mxu0 0.0
    %1760 = vmatpush1.msra.mxu0 0.0
    %1761 = vmatprep.subr.mxu0 0.0
    %1762 = vmatpush1.msra.mxu0 0.0
    %1763 = vmatprep.subr.mxu0 0.0
    %1764 = vmatpush1.msra.mxu0 0.0
    %1765 = vmatprep.subr.mxu0 0.0
    %1766 = vmatpush1.msra.mxu0 0.0
    %1767 = vmatprep.subr.mxu0 0.0
    %1768 = vmatpush1.msra.mxu0 0.0
    %1769 = vmatprep.subr.mxu0 0.0
    %1770 = vmatpush1.msra.mxu0 0.0
    %1771 = vmatprep.subr.mxu0 0.0
    %1772 = vmatpush1.msra.mxu0 0.0
    %1773 = vmatprep.subr.mxu0 0.0
    %1774 = vmatpush1.msra.mxu0 0.0
    %1775 = vmatprep.subr.mxu0 0.0
    %1776 = vmatpush1.msra.mxu0 0.0
    %1777 = vmatprep.subr.mxu0 0.0
    %1778 = vmatpush1.msra.mxu0 0.0
    %1779 = vmatprep.subr.mxu0 0.0
    %1780 = vmatpush1.msra.mxu0 0.0
    %1781 = vmatprep.subr.mxu0 0.0
    %1782 = vmatpush1.msra.mxu0 0.0
    %1783 = vmatprep.subr.mxu0 0.0
    %1784 = vmatpush1.msra.mxu0 0.0
    %1785 = vmatprep.subr.mxu0 0.0
    %1786 = vmatpush1.msra.mxu0 0.0
    %1787 = vmatprep.subr.mxu0 0.0
    %1788 = vmatpush1.msra.mxu0 0.0
    %1789 = vmatprep.subr.mxu0 0.0
    %1790 = vmatpush1.msra.mxu0 0.0
    %1791 = vmatprep.subr.mxu0 0.0
    %1792 = vmatpush1.msra.mxu0 0.0
    %1793 = vmatprep.subr.mxu0 0.0
    %1794 = vmatpush1.msra.mxu0 0.0
    %1795 = vmatprep.subr.mxu0 0.0
    %1796 = vmatpush1.msra.mxu0 0.0
    %1797 = vmatprep.subr.mxu0 0.0
    %1798 = vmatpush1.msra.mxu0 0.0
    %1799 = vmatprep.subr.mxu0 0.0
    %1800 = vmatpush1.msra.mxu0 0.0
    %1801 = vmatprep.subr.mxu0 0.0
    %1802 = vmatpush1.msra.mxu0 0.0
    %1803 = vmatprep.subr.mxu0 0.0
    %1804 = vmatpush1.msra.mxu0 0.0
    %1805 = vmatprep.subr.mxu0 0.0
    %1806 = vmatpush1.msra.mxu0 0.0
    %1807 = vmatprep.subr.mxu0 0.0
    %1808 = vmatpush1.msra.mxu0 0.0
    %1809 = vmatprep.subr.mxu0 0.0
    %1810 = vmatpush1.msra.mxu0 0.0
    %1811 = vmatprep.subr.mxu0 0.0
    %1812 = vmatpush1.msra.mxu0 0.0
    %1813 = vmatprep.subr.mxu0 0.0
    %1814 = vmatpush1.msra.mxu0 0.0
    %1815 = vmatprep.subr.mxu0 0.0
    %1816 = vmatpush1.msra.mxu0 0.0
    %1817 = vmatprep.subr.mxu0 0.0
    %1818 = vmatpush1.msra.mxu0 0.0
    %1819 = vmatprep.mubr.f32.mxu0 0.0
    %1820 = vmatmul.mubr.f32.gmra.mrb[0].mxu0 %v1750
    %v1821 = vpop.f32.mrb[0].mxu0
    %v1822 = vadd.f32 0.0, %v1821
    %v1823 = vpop.f32.mrb[0].mxu0
    %1824 = vmatprep.mubr.f32.mxu0 0.0
    %1825 = vmatmul.mubr.f32.gmra.mrb[0].mxu0 %v1753
    %v1826 = vpop.f32.mrb[0].mxu0
    %v1827 = vadd.f32 0.0, %v1826
    %v1828 = vpop.f32.mrb[0].mxu0
    %1829 = vdwg.mxu0
    %v1831 = vsel %vm1126, %v1585, 0
    %v1834 = vsel %vm1126, %v1586, 0
    %1836 = vmatprep.subr.mxu0 0.0
    %1837 = vmatpush1.msra.mxu0 %v1116
    %1838 = vmatprep.subr.mxu0 0.0
    %1839 = vmatpush1.msra.mxu0 %v1121
    %1840 = vmatprep.subr.mxu0 0.0
    %1841 = vmatpush1.msra.mxu0 0.0
    %1842 = vmatprep.subr.mxu0 0.0
    %1843 = vmatpush1.msra.mxu0 0.0
    %1844 = vmatprep.subr.mxu0 0.0
    %1845 = vmatpush1.msra.mxu0 0.0
    %1846 = vmatprep.subr.mxu0 0.0
    %1847 = vmatpush1.msra.mxu0 0.0
    %1848 = vmatprep.subr.mxu0 0.0
    %1849 = vmatpush1.msra.mxu0 0.0
    %1850 = vmatprep.subr.mxu0 0.0
    %1851 = vmatpush1.msra.mxu0 0.0
    %1852 = vmatprep.subr.mxu0 0.0
    %1853 = vmatpush1.msra.mxu0 0.0
    %1854 = vmatprep.subr.mxu0 0.0
    %1855 = vmatpush1.msra.mxu0 0.0
    %1856 = vmatprep.subr.mxu0 0.0
    %1857 = vmatpush1.msra.mxu0 0.0
    %1858 = vmatprep.subr.mxu0 0.0
    %1859 = vmatpush1.msra.mxu0 0.0
    %1860 = vmatprep.subr.mxu0 0.0
    %1861 = vmatpush1.msra.mxu0 0.0
    %1862 = vmatprep.subr.mxu0 0.0
    %1863 = vmatpush1.msra.mxu0 0.0
    %1864 = vmatprep.subr.mxu0 0.0
    %1865 = vmatpush1.msra.mxu0 0.0
    %1866 = vmatprep.subr.mxu0 0.0
    %1867 = vmatpush1.msra.mxu0 0.0
    %1868 = vmatprep.subr.mxu0 0.0
    %1869 = vmatpush1.msra.mxu0 0.0
    %1870 = vmatprep.subr.mxu0 0.0
    %1871 = vmatpush1.msra.mxu0 0.0
    %1872 = vmatprep.subr.mxu0 0.0
    %1873 = vmatpush1.msra.mxu0 0.0
    %1874 = vmatprep.subr.mxu0 0.0
    %1875 = vmatpush1.msra.mxu0 0.0
    %1876 = vmatprep.subr.mxu0 0.0
    %1877 = vmatpush1.msra.mxu0 0.0
    %1878 = vmatprep.subr.mxu0 0.0
    %1879 = vmatpush1.msra.mxu0 0.0
    %1880 = vmatprep.subr.mxu0 0.0
    %1881 = vmatpush1.msra.mxu0 0.0
    %1882 = vmatprep.subr.mxu0 0.0
    %1883 = vmatpush1.msra.mxu0 0.0
    %1884 = vmatprep.subr.mxu0 0.0
    %1885 = vmatpush1.msra.mxu0 0.0
    %1886 = vmatprep.subr.mxu0 0.0
    %1887 = vmatpush1.msra.mxu0 0.0
    %1888 = vmatprep.subr.mxu0 0.0
    %1889 = vmatpush1.msra.mxu0 0.0
    %1890 = vmatprep.subr.mxu0 0.0
    %1891 = vmatpush1.msra.mxu0 0.0
    %1892 = vmatprep.subr.mxu0 0.0
    %1893 = vmatpush1.msra.mxu0 0.0
    %1894 = vmatprep.subr.mxu0 0.0
    %1895 = vmatpush1.msra.mxu0 0.0
    %1896 = vmatprep.subr.mxu0 0.0
    %1897 = vmatpush1.msra.mxu0 0.0
    %1898 = vmatprep.subr.mxu0 0.0
    %1899 = vmatpush1.msra.mxu0 0.0
    %1900 = vmatprep.mubr.f32.mxu0 0.0
    %1901 = vmatmul.mubr.f32.gmra.mrb[0].mxu0 %v1831
    %v1902 = vpop.f32.mrb[0].mxu0
    %v1903 = vadd.f32 0.0, %v1902
    %v1904 = vpop.f32.mrb[0].mxu0
    %1905 = vmatprep.mubr.f32.mxu0 0.0
    %1906 = vmatmul.mubr.f32.gmra.mrb[0].mxu0 %v1834
    %v1907 = vpop.f32.mrb[0].mxu0
    %v1908 = vadd.f32 0.0, %v1907
    %v1909 = vpop.f32.mrb[0].mxu0
    %1910 = vdwg.mxu0
    %v1912 = vsel %vm1126, %v1741, 0
    %v1915 = vsel %vm1126, %v1746, 0
    %1917 = vmatprep.subr.mxu0 0.0
    %1918 = vmatpush1.msra.mxu0 %v140
    %1919 = vmatprep.subr.mxu0 0.0
    %1920 = vmatpush1.msra.mxu0 %v141
    %1921 = vmatprep.subr.mxu0 0.0
    %1922 = vmatpush1.msra.mxu0 0.0
    %1923 = vmatprep.subr.mxu0 0.0
    %1924 = vmatpush1.msra.mxu0 0.0
    %1925 = vmatprep.subr.mxu0 0.0
    %1926 = vmatpush1.msra.mxu0 0.0
    %1927 = vmatprep.subr.mxu0 0.0
    %1928 = vmatpush1.msra.mxu0 0.0
    %1929 = vmatprep.subr.mxu0 0.0
    %1930 = vmatpush1.msra.mxu0 0.0
    %1931 = vmatprep.subr.mxu0 0.0
    %1932 = vmatpush1.msra.mxu0 0.0
    %1933 = vmatprep.subr.mxu0 0.0
    %1934 = vmatpush1.msra.mxu0 0.0
    %1935 = vmatprep.subr.mxu0 0.0
    %1936 = vmatpush1.msra.mxu0 0.0
    %1937 = vmatprep.subr.mxu0 0.0
    %1938 = vmatpush1.msra.mxu0 0.0
    %1939 = vmatprep.subr.mxu0 0.0
    %1940 = vmatpush1.msra.mxu0 0.0
    %1941 = vmatprep.subr.mxu0 0.0
    %1942 = vmatpush1.msra.mxu0 0.0
    %1943 = vmatprep.subr.mxu0 0.0
    %1944 = vmatpush1.msra.mxu0 0.0
    %1945 = vmatprep.subr.mxu0 0.0
    %1946 = vmatpush1.msra.mxu0 0.0
    %1947 = vmatprep.subr.mxu0 0.0
    %1948 = vmatpush1.msra.mxu0 0.0
    %1949 = vmatprep.subr.mxu0 0.0
    %1950 = vmatpush1.msra.mxu0 0.0
    %1951 = vmatprep.subr.mxu0 0.0
    %1952 = vmatpush1.msra.mxu0 0.0
    %1953 = vmatprep.subr.mxu0 0.0
    %1954 = vmatpush1.msra.mxu0 0.0
    %1955 = vmatprep.subr.mxu0 0.0
    %1956 = vmatpush1.msra.mxu0 0.0
    %1957 = vmatprep.subr.mxu0 0.0
    %1958 = vmatpush1.msra.mxu0 0.0
    %1959 = vmatprep.subr.mxu0 0.0
    %1960 = vmatpush1.msra.mxu0 0.0
    %1961 = vmatprep.subr.mxu0 0.0
    %1962 = vmatpush1.msra.mxu0 0.0
    %1963 = vmatprep.subr.mxu0 0.0
    %1964 = vmatpush1.msra.mxu0 0.0
    %1965 = vmatprep.subr.mxu0 0.0
    %1966 = vmatpush1.msra.mxu0 0.0
    %1967 = vmatprep.subr.mxu0 0.0
    %1968 = vmatpush1.msra.mxu0 0.0
    %1969 = vmatprep.subr.mxu0 0.0
    %1970 = vmatpush1.msra.mxu0 0.0
    %1971 = vmatprep.subr.mxu0 0.0
    %1972 = vmatpush1.msra.mxu0 0.0
    %1973 = vmatprep.subr.mxu0 0.0
    %1974 = vmatpush1.msra.mxu0 0.0
    %1975 = vmatprep.subr.mxu0 0.0
    %1976 = vmatpush1.msra.mxu0 0.0
    %1977 = vmatprep.subr.mxu0 0.0
    %1978 = vmatpush1.msra.mxu0 0.0
    %1979 = vmatprep.subr.mxu0 0.0
    %1980 = vmatpush1.msra.mxu0 0.0
    %1981 = vmatprep.mubr.f32.mxu0 0.0
    %1982 = vmatmul.mubr.f32.gmra.mrb[0].mxu0 %v1912
    %v1983 = vpop.f32.mrb[0].mxu0
    %v1984 = vadd.f32 0.0, %v1983
    %v1985 = vpop.f32.mrb[0].mxu0
    %1986 = vmatprep.mubr.f32.mxu0 0.0
    %1987 = vmatmul.mubr.f32.gmra.mrb[0].mxu0 %v1915
    %v1988 = vpop.f32.mrb[0].mxu0
    %v1989 = vadd.f32 0.0, %v1988
    %v1990 = vpop.f32.mrb[0].mxu0
    %1991 = vdwg.mxu0
    %v1993 = vsel %vm1126, %v1660, 0
    %v1996 = vsel %vm1126, %v1665, 0
    %1998 = vmatprep.subr.mxu0 0.0
    %1999 = vmatpush1.msra.mxu0 %v138
    %2000 = vmatprep.subr.mxu0 0.0
    %2001 = vmatpush1.msra.mxu0 %v139
    %2002 = vmatprep.subr.mxu0 0.0
    %2003 = vmatpush1.msra.mxu0 0.0
    %2004 = vmatprep.subr.mxu0 0.0
    %2005 = vmatpush1.msra.mxu0 0.0
    %2006 = vmatprep.subr.mxu0 0.0
    %2007 = vmatpush1.msra.mxu0 0.0
    %2008 = vmatprep.subr.mxu0 0.0
    %2009 = vmatpush1.msra.mxu0 0.0
    %2010 = vmatprep.subr.mxu0 0.0
    %2011 = vmatpush1.msra.mxu0 0.0
    %2012 = vmatprep.subr.mxu0 0.0
    %2013 = vmatpush1.msra.mxu0 0.0
    %2014 = vmatprep.subr.mxu0 0.0
    %2015 = vmatpush1.msra.mxu0 0.0
    %2016 = vmatprep.subr.mxu0 0.0
    %2017 = vmatpush1.msra.mxu0 0.0
    %2018 = vmatprep.subr.mxu0 0.0
    %2019 = vmatpush1.msra.mxu0 0.0
    %2020 = vmatprep.subr.mxu0 0.0
    %2021 = vmatpush1.msra.mxu0 0.0
    %2022 = vmatprep.subr.mxu0 0.0
    %2023 = vmatpush1.msra.mxu0 0.0
    %2024 = vmatprep.subr.mxu0 0.0
    %2025 = vmatpush1.msra.mxu0 0.0
    %2026 = vmatprep.subr.mxu0 0.0
    %2027 = vmatpush1.msra.mxu0 0.0
    %2028 = vmatprep.subr.mxu0 0.0
    %2029 = vmatpush1.msra.mxu0 0.0
    %2030 = vmatprep.subr.mxu0 0.0
    %2031 = vmatpush1.msra.mxu0 0.0
    %2032 = vmatprep.subr.mxu0 0.0
    %2033 = vmatpush1.msra.mxu0 0.0
    %2034 = vmatprep.subr.mxu0 0.0
    %2035 = vmatpush1.msra.mxu0 0.0
    %2036 = vmatprep.subr.mxu0 0.0
    %2037 = vmatpush1.msra.mxu0 0.0
    %2038 = vmatprep.subr.mxu0 0.0
    %2039 = vmatpush1.msra.mxu0 0.0
    %2040 = vmatprep.subr.mxu0 0.0
    %2041 = vmatpush1.msra.mxu0 0.0
    %2042 = vmatprep.subr.mxu0 0.0
    %2043 = vmatpush1.msra.mxu0 0.0
    %2044 = vmatprep.subr.mxu0 0.0
    %2045 = vmatpush1.msra.mxu0 0.0
    %2046 = vmatprep.subr.mxu0 0.0
    %2047 = vmatpush1.msra.mxu0 0.0
    %2048 = vmatprep.subr.mxu0 0.0
    %2049 = vmatpush1.msra.mxu0 0.0
    %2050 = vmatprep.subr.mxu0 0.0
    %2051 = vmatpush1.msra.mxu0 0.0
    %2052 = vmatprep.subr.mxu0 0.0
    %2053 = vmatpush1.msra.mxu0 0.0
    %2054 = vmatprep.subr.mxu0 0.0
    %2055 = vmatpush1.msra.mxu0 0.0
    %2056 = vmatprep.subr.mxu0 0.0
    %2057 = vmatpush1.msra.mxu0 0.0
    %2058 = vmatprep.subr.mxu0 0.0
    %2059 = vmatpush1.msra.mxu0 0.0
    %2060 = vmatprep.subr.mxu0 0.0
    %2061 = vmatpush1.msra.mxu0 0.0
    %2062 = vmatprep.mubr.f32.mxu0 0.0
    %2063 = vmatmul.mubr.f32.gmra.mrb[0].mxu0 %v1993
    %v2064 = vpop.f32.mrb[0].mxu0
    %v2065 = vadd.f32 %v1984, %v2064
    %v2066 = vpop.f32.mrb[0].mxu0
    %2067 = vmatprep.mubr.f32.mxu0 0.0
    %2068 = vmatmul.mubr.f32.gmra.mrb[0].mxu0 %v1996
    %v2069 = vpop.f32.mrb[0].mxu0
    %v2070 = vadd.f32 %v1989, %v2069
    %v2071 = vpop.f32.mrb[0].mxu0
    %2072 = vdwg.mxu0
    %v2074 = vsel %vm1126, %v1822, 0
    %v2077 = vsel %vm1126, %v1827, 0
    %2079 = vmatprep.subr.mxu0 0.0
    %2080 = vmatpush1.msra.mxu0 %v142
    %2081 = vmatprep.subr.mxu0 0.0
    %2082 = vmatpush1.msra.mxu0 %v143
    %2083 = vmatprep.subr.mxu0 0.0
    %2084 = vmatpush1.msra.mxu0 0.0
    %2085 = vmatprep.subr.mxu0 0.0
    %2086 = vmatpush1.msra.mxu0 0.0
    %2087 = vmatprep.subr.mxu0 0.0
    %2088 = vmatpush1.msra.mxu0 0.0
    %2089 = vmatprep.subr.mxu0 0.0
    %2090 = vmatpush1.msra.mxu0 0.0
    %2091 = vmatprep.subr.mxu0 0.0
    %2092 = vmatpush1.msra.mxu0 0.0
    %2093 = vmatprep.subr.mxu0 0.0
    %2094 = vmatpush1.msra.mxu0 0.0
    %2095 = vmatprep.subr.mxu0 0.0
    %2096 = vmatpush1.msra.mxu0 0.0
    %2097 = vmatprep.subr.mxu0 0.0
    %2098 = vmatpush1.msra.mxu0 0.0
    %2099 = vmatprep.subr.mxu0 0.0
    %2100 = vmatpush1.msra.mxu0 0.0
    %2101 = vmatprep.subr.mxu0 0.0
    %2102 = vmatpush1.msra.mxu0 0.0
    %2103 = vmatprep.subr.mxu0 0.0
    %2104 = vmatpush1.msra.mxu0 0.0
    %2105 = vmatprep.subr.mxu0 0.0
    %2106 = vmatpush1.msra.mxu0 0.0
    %2107 = vmatprep.subr.mxu0 0.0
    %2108 = vmatpush1.msra.mxu0 0.0
    %2109 = vmatprep.subr.mxu0 0.0
    %2110 = vmatpush1.msra.mxu0 0.0
    %2111 = vmatprep.subr.mxu0 0.0
    %2112 = vmatpush1.msra.mxu0 0.0
    %2113 = vmatprep.subr.mxu0 0.0
    %2114 = vmatpush1.msra.mxu0 0.0
    %2115 = vmatprep.subr.mxu0 0.0
    %2116 = vmatpush1.msra.mxu0 0.0
    %2117 = vmatprep.subr.mxu0 0.0
    %2118 = vmatpush1.msra.mxu0 0.0
    %2119 = vmatprep.subr.mxu0 0.0
    %2120 = vmatpush1.msra.mxu0 0.0
    %2121 = vmatprep.subr.mxu0 0.0
    %2122 = vmatpush1.msra.mxu0 0.0
    %2123 = vmatprep.subr.mxu0 0.0
    %2124 = vmatpush1.msra.mxu0 0.0
    %2125 = vmatprep.subr.mxu0 0.0
    %2126 = vmatpush1.msra.mxu0 0.0
    %2127 = vmatprep.subr.mxu0 0.0
    %2128 = vmatpush1.msra.mxu0 0.0
    %2129 = vmatprep.subr.mxu0 0.0
    %2130 = vmatpush1.msra.mxu0 0.0
    %2131 = vmatprep.subr.mxu0 0.0
    %2132 = vmatpush1.msra.mxu0 0.0
    %2133 = vmatprep.subr.mxu0 0.0
    %2134 = vmatpush1.msra.mxu0 0.0
    %2135 = vmatprep.subr.mxu0 0.0
    %2136 = vmatpush1.msra.mxu0 0.0
    %2137 = vmatprep.subr.mxu0 0.0
    %2138 = vmatpush1.msra.mxu0 0.0
    %2139 = vmatprep.subr.mxu0 0.0
    %2140 = vmatpush1.msra.mxu0 0.0
    %2141 = vmatprep.subr.mxu0 0.0
    %2142 = vmatpush1.msra.mxu0 0.0
    %2143 = vmatprep.mubr.f32.mxu0 0.0
    %2144 = vmatmul.mubr.f32.gmra.mrb[0].mxu0 %v2074
    %v2145 = vpop.f32.mrb[0].mxu0
    %v2146 = vadd.f32 0.0, %v2145
    %v2147 = vpop.f32.mrb[0].mxu0
    %2148 = vmatprep.mubr.f32.mxu0 0.0
    %2149 = vmatmul.mubr.f32.gmra.mrb[0].mxu0 %v2077
    %v2150 = vpop.f32.mrb[0].mxu0
    %v2151 = vadd.f32 0.0, %v2150
    %v2152 = vpop.f32.mrb[0].mxu0
    %2153 = vdwg.mxu0
    %v2154 = vadd.f32 %v2065, %v2146
    %v2155 = vadd.f32 %v2070, %v2151
    %v2157 = vsel %vm1126, %v1903, 0
    %v2160 = vsel %vm1126, %v1908, 0
    %2162 = vmatprep.subr.mxu0 0.0
    %2163 = vmatpush1.msra.mxu0 %v144
    %2164 = vmatprep.subr.mxu0 0.0
    %2165 = vmatpush1.msra.mxu0 %v145
    %2166 = vmatprep.subr.mxu0 0.0
    %2167 = vmatpush1.msra.mxu0 0.0
    %2168 = vmatprep.subr.mxu0 0.0
    %2169 = vmatpush1.msra.mxu0 0.0
    %2170 = vmatprep.subr.mxu0 0.0
    %2171 = vmatpush1.msra.mxu0 0.0
    %2172 = vmatprep.subr.mxu0 0.0
    %2173 = vmatpush1.msra.mxu0 0.0
    %2174 = vmatprep.subr.mxu0 0.0
    %2175 = vmatpush1.msra.mxu0 0.0
    %2176 = vmatprep.subr.mxu0 0.0
    %2177 = vmatpush1.msra.mxu0 0.0
    %2178 = vmatprep.subr.mxu0 0.0
    %2179 = vmatpush1.msra.mxu0 0.0
    %2180 = vmatprep.subr.mxu0 0.0
    %2181 = vmatpush1.msra.mxu0 0.0
    %2182 = vmatprep.subr.mxu0 0.0
    %2183 = vmatpush1.msra.mxu0 0.0
    %2184 = vmatprep.subr.mxu0 0.0
    %2185 = vmatpush1.msra.mxu0 0.0
    %2186 = vmatprep.subr.mxu0 0.0
    %2187 = vmatpush1.msra.mxu0 0.0
    %2188 = vmatprep.subr.mxu0 0.0
    %2189 = vmatpush1.msra.mxu0 0.0
    %2190 = vmatprep.subr.mxu0 0.0
    %2191 = vmatpush1.msra.mxu0 0.0
    %2192 = vmatprep.subr.mxu0 0.0
    %2193 = vmatpush1.msra.mxu0 0.0
    %2194 = vmatprep.subr.mxu0 0.0
    %2195 = vmatpush1.msra.mxu0 0.0
    %2196 = vmatprep.subr.mxu0 0.0
    %2197 = vmatpush1.msra.mxu0 0.0
    %2198 = vmatprep.subr.mxu0 0.0
    %2199 = vmatpush1.msra.mxu0 0.0
    %2200 = vmatprep.subr.mxu0 0.0
    %2201 = vmatpush1.msra.mxu0 0.0
    %2202 = vmatprep.subr.mxu0 0.0
    %2203 = vmatpush1.msra.mxu0 0.0
    %2204 = vmatprep.subr.mxu0 0.0
    %2205 = vmatpush1.msra.mxu0 0.0
    %2206 = vmatprep.subr.mxu0 0.0
    %2207 = vmatpush1.msra.mxu0 0.0
    %2208 = vmatprep.subr.mxu0 0.0
    %2209 = vmatpush1.msra.mxu0 0.0
    %2210 = vmatprep.subr.mxu0 0.0
    %2211 = vmatpush1.msra.mxu0 0.0
    %2212 = vmatprep.subr.mxu0 0.0
    %2213 = vmatpush1.msra.mxu0 0.0
    %2214 = vmatprep.subr.mxu0 0.0
    %2215 = vmatpush1.msra.mxu0 0.0
    %2216 = vmatprep.subr.mxu0 0.0
    %2217 = vmatpush1.msra.mxu0 0.0
    %2218 = vmatprep.subr.mxu0 0.0
    %2219 = vmatpush1.msra.mxu0 0.0
    %2220 = vmatprep.subr.mxu0 0.0
    %2221 = vmatpush1.msra.mxu0 0.0
    %2222 = vmatprep.subr.mxu0 0.0
    %2223 = vmatpush1.msra.mxu0 0.0
    %2224 = vmatprep.subr.mxu0 0.0
    %2225 = vmatpush1.msra.mxu0 0.0
    %2226 = vmatprep.mubr.f32.mxu0 0.0
    %2227 = vmatmul.mubr.f32.gmra.mrb[0].mxu0 %v2157
    %v2228 = vpop.f32.mrb[0].mxu0
    %v2229 = vadd.f32 0.0, %v2228
    %v2230 = vpop.f32.mrb[0].mxu0
    %2231 = vmatprep.mubr.f32.mxu0 0.0
    %2232 = vmatmul.mubr.f32.gmra.mrb[0].mxu0 %v2160
    %v2233 = vpop.f32.mrb[0].mxu0
    %v2234 = vadd.f32 0.0, %v2233
    %v2235 = vpop.f32.mrb[0].mxu0
    %2236 = vdwg.mxu0
    %v2237 = vadd.f32 %v2154, %v2229
    %v2238 = vadd.f32 %v2155, %v2234
    %v2239 = vlaneseq
    %v2240 = vshrl.u32 %v2239, 7
    %v2241 = vsub.s32 2, %v2240
    %v2242 = vrot.slane %v73, %v2241
    %v2243 = vadd.f32 %v2237, %v2242
    %v2244 = vadd.f32 %v2238, %v2242
    %2245 = vst.msk [vmem:[#allocation10] sm:$0xff] %vm74, %v2243
    %2246 = vst.msk [vmem:[#allocation10 + $0x8] sm:$0xff] %vm74, %v2244
    // Predicated region
    $region34: #{tpu_custom_call.1} parent=1 // pred_check
      _
    $region35: #{tpu_custom_call.1} parent=1 // pred_check_branch
      %2248 = sbr.rel (0) target = $region37
    $region36: #{tpu_custom_call.1} parent=1 // pred_region
      %s2250 = ssub.s32 256, 256
      %2251 = vsyncadd [#allocation4], %s2250
      %s2252 = sshll.u32 [#allocation10], 4
      %s2253 = int_to_ptr.vmem [resolvable:$true] %s2252
      %2258 = dma.vmem_to_hbm [thread:$0]  %s2253, 256, %s4, [#allocation4], 128, 128, 8
    $region37: #{tpu_custom_call.1} parent=1 // pred_fallthru
      _
    // Predicated region
    $region38: #{tpu_custom_call.1} parent=1 // pred_check
      _
    $region39: #{tpu_custom_call.1} parent=1 // pred_check_branch
      %2260 = sbr.rel (0) target = $region41
    $region40: #{tpu_custom_call.1} parent=1 // pred_region
      %2261 = dma.done [#allocation4], 256
    $region41: #{tpu_custom_call.1} parent=1 // pred_fallthru
      _
    %2262 = vsyncpa [#allocation3], 1
    %2263 = vsyncpa [#allocation6], 1
    %2264 = vsyncpa [#allocation9], 1
    %2265 = vsyncpa [#allocation4], 1

</llo_original>
